<compile_context>
chip_gen: v7x
topology: tpu7x:2x2x1
jax: 0.10.0
libtpu: 0.0.40
codegen_flags: <defaults>
</compile_context>

<pallas_src>
import functools

import numpy as np
import jax
import jax.numpy as jnp
from jax import lax
from jax.experimental import pallas as pl
from jax.experimental.pallas import tpu as pltpu


def _round_up(a, m):
    return (a + m - 1) // m * m


def _cdiv(a, b):
    return (a + b - 1) // b


def _vmem_limit(buf_bytes, scratch_bytes=0):
    """Double-buffered tile bytes + scratch + slack, clamped to a safe range."""
    total = 2 * buf_bytes + scratch_bytes + (2 << 20)
    return int(min(max(total, 8 << 20), 32 << 20))


# ----------------------------------------------------------------------------
# Kernel 1: tiled matmul + bias + ReLU (encoder conv via im2col)
# ----------------------------------------------------------------------------
def _matmul_bias_relu_f32_kernel(x_ref, w_ref, b_ref, o_ref):
    # f32 output: the output block is resident across the K axis (its index_map
    # ignores k), so accumulate directly into it -- no scratch copy needed.
    k = pl.program_id(2)

    @pl.when(k == 0)
    def _():
        o_ref[...] = jnp.zeros_like(o_ref)

    o_ref[...] += jnp.dot(x_ref[...], w_ref[...],
                          preferred_element_type=jnp.float32)

    @pl.when(k == pl.num_programs(2) - 1)
    def _():
        o_ref[...] = jnp.maximum(o_ref[...] + b_ref[...], 0.0)


def _matmul_bias_relu_cast_kernel(x_ref, w_ref, b_ref, o_ref, acc_ref):
    # Narrow (bf16) output: keep an f32 VMEM accumulator, cast in the epilogue.
    k = pl.program_id(2)

    @pl.when(k == 0)
    def _():
        acc_ref[...] = jnp.zeros_like(acc_ref)

    acc_ref[...] += jnp.dot(x_ref[...], w_ref[...],
                            preferred_element_type=jnp.float32)

    @pl.when(k == pl.num_programs(2) - 1)
    def _():
        o_ref[...] = jnp.maximum(acc_ref[...] + b_ref[...], 0.0).astype(o_ref.dtype)


def pallas_matmul_bias_relu(x, w, b, out_dtype=jnp.float32):
    """relu(x @ w + b).  x: (M, K), w: (K, N), b: (N,).  Returns (M, N) out_dtype."""
    M, K = x.shape
    N = w.shape[1]
    out_dtype = np.dtype(out_dtype)

    # Tiles: lane dims (TK, TN) multiples of 128; sublane TM multiple of 16
    # (bf16 vregs pack [16,128]).  Large caps amortize per-grid-step overhead.
    TM = min(1024, _round_up(M, 16))
    if _round_up(M, TM) // TM < 2 and M >= 32:
        # Guarantee >=2 blocks on the parallel M axis so v7x's 2nd TC isn't idle.
        TM = _round_up(_cdiv(M, 2), 16)
    TK = min(512, _round_up(K, 128))
    TN = min(512, _round_up(N, 128))
    Mp, Kp, Np = _round_up(M, TM), _round_up(K, TK), _round_up(N, TN)

    # Caller passes bf16 activations already (cast happens before im2col), so
    # the pad below runs on bf16 data -- no f32 slab round-trip.
    x_p = jnp.pad(x.astype(jnp.bfloat16), ((0, Mp - M), (0, Kp - K)))
    w_p = jnp.pad(w.astype(jnp.bfloat16), ((0, Kp - K), (0, Np - N)))
    b_p = jnp.pad(b.astype(jnp.float32), (0, Np - N)).reshape(1, Np)

    is_f32_out = out_dtype == np.dtype(np.float32)
    kernel = _matmul_bias_relu_f32_kernel if is_f32_out else _matmul_bias_relu_cast_kernel
    scratch = [] if is_f32_out else [pltpu.VMEM((TM, TN), jnp.float32)]
    scratch_bytes = 0 if is_f32_out else TM * TN * 4
    buf_bytes = (TM * TK * 2) + (TK * TN * 2) + (TN * 4) + (TM * TN * out_dtype.itemsize)

    out = pl.pallas_call(
        kernel,
        out_shape=jax.ShapeDtypeStruct((Mp, Np), out_dtype),
        grid=(Mp // TM, Np // TN, Kp // TK),
        in_specs=[
            pl.BlockSpec((TM, TK), lambda i, j, k: (i, k)),
            pl.BlockSpec((TK, TN), lambda i, j, k: (k, j)),
            pl.BlockSpec((1, TN), lambda i, j, k: (0, j)),
        ],
        out_specs=pl.BlockSpec((TM, TN), lambda i, j, k: (i, j)),
        scratch_shapes=scratch,
        compiler_params=pltpu.CompilerParams(
            dimension_semantics=("parallel", "parallel", "arbitrary"),
            vmem_limit_bytes=_vmem_limit(buf_bytes, scratch_bytes)),
    )(x_p, w_p, b_p)
    return out[:M, :N]


# ----------------------------------------------------------------------------
# Kernel 2: batched masked average pooling (HW-tiled MXU contraction)
# ----------------------------------------------------------------------------
def _masked_pool_kernel(f_ref, m_ref, invden_ref, o_ref, acc_ref):
    # f: (1, THW, Cp), m: (1, Pp, THW), invden: (1, Pp, 1) -> o: (1, Pp, Cp)
    hw = pl.program_id(1)

    @pl.when(hw == 0)
    def _():
        acc_ref[...] = jnp.zeros_like(acc_ref)

    acc_ref[...] += jnp.dot(m_ref[0], f_ref[0], preferred_element_type=jnp.float32)

    @pl.when(hw == pl.num_programs(1) - 1)
    def _():
        o_ref[0] = acc_ref[...] * invden_ref[0]


def pallas_masked_pool_batched(feats, masks):
    """feats: (B, HW, C), masks: (B, P, HW) -> (B, P, C).
    out[b, p] = sum_hw m[b,p,hw] * f[b,hw,:] / (sum_hw m[b,p,hw] + 1e-5)."""
    B, HW, C = feats.shape
    P = masks.shape[1]
    Pp = _round_up(P, 8)
    Cp = _round_up(C, 128)                      # lane-dense output / MXU width
    THW = min(2048, _round_up(HW, 128))         # bounded VMEM working set
    HWp = _round_up(HW, THW)

    feats_p = jnp.pad(feats.astype(jnp.float32), ((0, 0), (0, HWp - HW), (0, Cp - C)))
    masks_p = jnp.pad(masks.astype(jnp.float32), ((0, 0), (0, Pp - P), (0, HWp - HW)))
    # Denominator precomputed over the full HW extent -> the kernel has no
    # cross-lane reductions and the divide becomes one VPU multiply at finalize.
    inv_den = 1.0 / (jnp.sum(masks_p, axis=2, keepdims=True) + 1e-5)     # (B, Pp, 1)

    buf_bytes = (THW * Cp * 4) + (Pp * THW * 4) + (Pp * 4) + (Pp * Cp * 4)
    out = pl.pallas_call(
        _masked_pool_kernel,
        out_shape=jax.ShapeDtypeStruct((B, Pp, Cp), jnp.float32),
        grid=(B, HWp // THW),
        in_specs=[
            pl.BlockSpec((1, THW, Cp), lambda b, hw: (b, hw, 0)),
            pl.BlockSpec((1, Pp, THW), lambda b, hw: (b, 0, hw)),
            pl.BlockSpec((1, Pp, 1), lambda b, hw: (b, 0, 0)),
        ],
        out_specs=pl.BlockSpec((1, Pp, Cp), lambda b, hw: (b, 0, 0)),
        scratch_shapes=[pltpu.VMEM((Pp, Cp), jnp.float32)],
        compiler_params=pltpu.CompilerParams(
            dimension_semantics=("parallel", "arbitrary"),
            vmem_limit_bytes=_vmem_limit(buf_bytes, Pp * Cp * 4)),
    )(feats_p, masks_p, inv_den)
    return out[:, :P, :C]


# ----------------------------------------------------------------------------
# Kernel 3: scaled cosine similarity to prototypes (calDist), channels-major
# ----------------------------------------------------------------------------
def _cos_dist_kernel(p_ref, f_ref, psq_ref, fsq_ref, o_ref):
    # p: (Pp, C), f: (C, TM), psq: (Pp, 1), fsq: (1, TM) -> o: (Pp, TM)
    dots = jnp.dot(p_ref[...], f_ref[...], preferred_element_type=jnp.float32)
    # torch cosine_similarity clamps each norm independently at eps=1e-8:
    # 1/max(||x||, eps) == min(rsqrt(||x||^2), 1e8).  rsqrt runs on the EUP.
    inv_fn = jnp.minimum(lax.rsqrt(jnp.maximum(fsq_ref[...], 0.0)), 1e8)   # (1, TM)
    inv_pn = jnp.minimum(lax.rsqrt(jnp.maximum(psq_ref[...], 0.0)), 1e8)   # (Pp, 1)
    o_ref[...] = dots * (inv_fn * (20.0 * inv_pn))


def pallas_cos_dist(fts_cm, protos):
    """fts_cm: (C, M) channels-major, protos: (P, C) -> (P, M) scaled cos-sim."""
    C, M = fts_cm.shape
    P = protos.shape[0]
    TM = min(512, _round_up(max(M, 1), 128))
    if _round_up(M, TM) // TM < 2 and M >= 256:
        TM = _round_up(_cdiv(M, 2), 128)        # >=2 parallel blocks for v7x
    Mp = _round_up(M, TM)
    Pp = _round_up(P, 8)

    f_p = jnp.pad(fts_cm.astype(jnp.float32), ((0, 0), (0, Mp - M)))
    protos_p = jnp.pad(protos.astype(jnp.float32), ((0, Pp - P), (0, 0)))
    psq = jnp.sum(protos_p * protos_p, axis=1, keepdims=True)              # (Pp, 1)
    fsq = jnp.sum(f_p * f_p, axis=0, keepdims=True)                        # (1, Mp)

    buf_bytes = (Pp * C * 4) + (C * TM * 4) + (Pp * 4) + (TM * 4) + (Pp * TM * 4)
    out = pl.pallas_call(
        _cos_dist_kernel,
        out_shape=jax.ShapeDtypeStruct((Pp, Mp), jnp.float32),
        grid=(Mp // TM,),
        in_specs=[
            pl.BlockSpec((Pp, C), lambda i: (0, 0)),
            pl.BlockSpec((C, TM), lambda i: (0, i)),
            pl.BlockSpec((Pp, 1), lambda i: (0, 0)),
            pl.BlockSpec((1, TM), lambda i: (0, i)),
        ],
        out_specs=pl.BlockSpec((Pp, TM), lambda i: (0, i)),
        compiler_params=pltpu.CompilerParams(
            dimension_semantics=("parallel",),
            vmem_limit_bytes=_vmem_limit(buf_bytes)),
    )(protos_p, f_p, psq, fsq)
    return out[:P, :M]


# ----------------------------------------------------------------------------
# Plain-JAX glue
# ----------------------------------------------------------------------------
def bilinear_resize_nchw(x, out_hw):
    """PyTorch F.interpolate(mode='bilinear', align_corners=False) semantics."""
    N, C, H, W = x.shape
    oh, ow = int(out_hw[0]), int(out_hw[1])
    if (H, W) == (oh, ow):
        return x

    def src_idx(out_size, in_size):
        scale = in_size / out_size
        s = (jnp.arange(out_size, dtype=jnp.float32) + 0.5) * scale - 0.5
        s = jnp.maximum(s, 0.0)
        i0 = jnp.minimum(jnp.floor(s).astype(jnp.int32), in_size - 1)
        i1 = jnp.minimum(i0 + 1, in_size - 1)
        w1 = jnp.clip(s - i0.astype(jnp.float32), 0.0, 1.0)
        return i0, i1, w1

    y0, y1, wy = src_idx(oh, H)
    x0, x1, wx = src_idx(ow, W)
    top = x[:, :, y0, :]
    bot = x[:, :, y1, :]
    v = top * (1.0 - wy)[None, None, :, None] + bot * wy[None, None, :, None]
    left = v[:, :, :, x0]
    right = v[:, :, :, x1]
    return left * (1.0 - wx)[None, None, None, :] + right * wx[None, None, None, :]


def conv3x3_s2_relu(x, w, b, out_dtype=jnp.float32):
    """3x3 conv, stride 2, pad 1, ReLU.  x: (N, Cin, H, W) NCHW; w: (Cout, Cin, 3, 3)."""
    N, Cin, H, W = x.shape
    Cout = w.shape[0]
    OH, OW = H // 2, W // 2
    K = 9 * Cin

    if K < 128:
        # Cin=3 first conv (K=27, N=16): the MXU tile would be <2% utilized and
        # padding K/N to 128 inflates HBM traffic ~4.7x, so run it in plain XLA.
        y = lax.conv_general_dilated(
            x, w, window_strides=(2, 2), padding=((1, 1), (1, 1)),
            dimension_numbers=("NCHW", "OIHW", "NCHW"))
        return jnp.maximum(y + b[None, :, None, None], 0.0).astype(out_dtype)

    # Cast to bf16 BEFORE building the 9x-expanded im2col slab (halves HBM traffic).
    x_nhwc = x.astype(jnp.bfloat16).transpose(0, 2, 3, 1)
    xp = jnp.pad(x_nhwc, ((0, 0), (1, 1), (1, 1), (0, 0)))
    # TODO(synk): the stride-2 shifted-window gather cannot be expressed by a
    # BlockSpec index_map, so im2col stays in XLA glue; the matmul itself is tiled.
    cols = [xp[:, dy:dy + 2 * OH:2, dx:dx + 2 * OW:2, :]
            for dy in range(3) for dx in range(3)]                   # 9 x (N, OH, OW, Cin)
    # Fuse the K zero-padding (next multiple of 128) into the concat so the slab
    # is materialized exactly once, already padded, in bf16.
    K128 = _round_up(K, 128)
    if K128 > K:
        cols.append(jnp.zeros((N, OH, OW, K128 - K), jnp.bfloat16))
    xmat = jnp.concatenate(cols, axis=-1).reshape(N * OH * OW, K128)
    wmat = w.transpose(2, 3, 1, 0).reshape(K, Cout)                  # (dy, dx, Cin) x Cout
    wmat = jnp.pad(wmat, ((0, K128 - K), (0, 0)))
    ymat = pallas_matmul_bias_relu(xmat, wmat, b, out_dtype=out_dtype)
    return ymat.reshape(N, OH, OW, Cout).transpose(0, 3, 1, 2)


def encoder(params, x):
    # TODO(synk): original PSPNet `Encoder` backbone is not defined in the reference
    # snippet; this is a deterministic 2-layer conv stand-in producing C=32 features
    # at 1/4 spatial resolution (hot-path matmuls run in the tiled Pallas kernel).
    x = conv3x3_s2_relu(x, params["w1"], params["b1"], out_dtype=jnp.bfloat16)
    x = conv3x3_s2_relu(x, params["w2"], params["b2"], out_dtype=jnp.float32)
    return x


def cal_dist_all(fts, protos):
    """fts: (N, C, h, w), protos: (P, C) -> (N, P, h, w) scaled cosine similarity."""
    N, C, h, w = fts.shape
    P = protos.shape[0]
    # Channels-major (C, N*h*w) falls straight out of NCHW for N == 1; for N > 1
    # only a small leading-axes transpose is needed (no per-pixel NHWC shuffle).
    if N == 1:
        f_cm = fts.reshape(C, h * w)
    else:
        f_cm = jnp.transpose(fts, (1, 0, 2, 3)).reshape(C, N * h * w)
    dist = pallas_cos_dist(f_cm, protos)                    # (P, N*h*w), lane-dense
    return dist.reshape(P, N, h, w).transpose(1, 0, 2, 3)


def cross_entropy_ignore(logits, labels, ignore=255):
    """logits: (1, nc, H, W), labels: (H, W) int32; mean over non-ignored pixels."""
    logp = jax.nn.log_softmax(logits, axis=1)[0]            # (nc, H, W)
    valid = labels != ignore
    lbl = jnp.where(valid, labels, 0)
    picked = jnp.take_along_axis(logp, lbl[None, :, :], axis=0)[0]
    num = jnp.sum(jnp.where(valid, -picked, 0.0))
    den = jnp.maximum(jnp.sum(valid), 1).astype(jnp.float32)
    return num / den


def align_loss_fn(qry_fts, pred, supp_fts, fore_mask, back_mask):
    """Prototype-alignment loss (training branch)."""
    n_ways, n_shots = int(fore_mask.shape[0]), int(fore_mask.shape[1])
    N, C, h, w = qry_fts.shape
    pred_mask = jnp.argmax(pred, axis=1)                                   # (N, h, w)
    masks = jnp.stack([(pred_mask == i) for i in range(1 + n_ways)], axis=0)
    masks = masks.reshape(1 + n_ways, N * h * w).astype(jnp.float32)       # (1+Wa, NHW)
    way_counts = jnp.sum(masks, axis=1)                                    # (1+Wa,)

    f_flat = qry_fts.transpose(0, 2, 3, 1).reshape(N * h * w, C)
    qry_prototypes = pallas_masked_pool_batched(f_flat[None], masks[None])[0]  # (1+Wa, C)

    loss = jnp.float32(0.0)
    for way in range(n_ways):
        not_skip = (way_counts[way + 1] > 0).astype(jnp.float32)           # skip_ways gate
        protos = jnp.stack([qry_prototypes[0], qry_prototypes[way + 1]], axis=0)  # (2, C)
        for shot in range(n_shots):
            img_fts = supp_fts[way, shot][None]                            # (1, C, h, w)
            supp_pred = cal_dist_all(img_fts, protos)                      # (1, 2, h, w)
            supp_pred = bilinear_resize_nchw(supp_pred, fore_mask.shape[-2:])
            fm = fore_mask[way, shot]
            bm = back_mask[way, shot]
            label = jnp.full(fm.shape, 255, dtype=jnp.int32)
            label = jnp.where(fm == 1, 1, label)
            label = jnp.where(bm == 1, 0, label)
            ce = cross_entropy_ignore(supp_pred, label)
            loss = loss + not_skip * ce / n_shots / n_ways
    return loss


def panet_forward(params, supp_imgs, fore_mask, back_mask, qry_imgs, training=True):
    """Mirrors PANetPSPNet.forward.
    supp_imgs: (Wa, Sh, B, 3, H, W), fore/back_mask: (Wa, Sh, B, H, W), qry_imgs: (N, 3, H, W)
    """
    n_ways, n_shots = int(supp_imgs.shape[0]), int(supp_imgs.shape[1])
    n_queries = int(qry_imgs.shape[0])
    batch_size = 1
    in_ch = int(qry_imgs.shape[1])
    img_size = (int(supp_imgs.shape[-2]), int(supp_imgs.shape[-1]))
    H, W = img_size

    imgs_concat = jnp.concatenate(
        [supp_imgs.reshape(n_ways * n_shots, in_ch, *img_size), qry_imgs], axis=0)
    img_fts = encoder(params, imgs_concat)                     # (Wa*Sh + N, C, h, w)
    fts_size = img_fts.shape[-2:]
    C = img_fts.shape[1]
    supp_fts = img_fts[:n_ways * n_shots * batch_size].reshape(
        n_ways, n_shots, batch_size, C, *fts_size)
    qry_fts = img_fts[n_ways * n_shots * batch_size:].reshape(
        n_queries, batch_size, C, *fts_size)

    align_loss = jnp.float32(0.0)
    outputs = []
    for epi in range(batch_size):
        # --- batched masked average pooling over all (way, shot) support images ---
        sf = supp_fts[:, :, epi].reshape(n_ways * n_shots, C, *fts_size)
        sf_up = bilinear_resize_nchw(sf, img_size)                         # (Wa*Sh, C, H, W)
        feats = sf_up.transpose(0, 2, 3, 1).reshape(n_ways * n_shots, H * W, C)
        fg = fore_mask[:, :, epi].reshape(n_ways * n_shots, H * W)
        bg = back_mask[:, :, epi].reshape(n_ways * n_shots, H * W)
        msk = jnp.stack([fg, bg], axis=1).astype(jnp.float32)              # (Wa*Sh, 2, HW)
        pooled = pallas_masked_pool_batched(feats, msk)                    # (Wa*Sh, 2, C)
        pooled = pooled.reshape(n_ways, n_shots, 2, C)

        # getPrototype
        fg_prototypes = [jnp.mean(pooled[w_, :, 0, :], axis=0, keepdims=True)
                         for w_ in range(n_ways)]                          # list of (1, C)
        bg_prototype = jnp.mean(pooled[:, :, 1, :], axis=(0, 1))[None]     # (1, C)
        prototypes = jnp.concatenate([bg_prototype] + fg_prototypes, axis=0)  # (1+Wa, C)

        pred = cal_dist_all(qry_fts[:, epi], prototypes)                   # (N, 1+Wa, h, w)
        outputs.append(bilinear_resize_nchw(pred, img_size))

        if training:
            align_loss = align_loss + align_loss_fn(
                qry_fts[:, epi], pred, supp_fts[:, :, epi],
                fore_mask[:, :, epi], back_mask[:, :, epi])

    output = jnp.stack(outputs, axis=1)                   # (N, B, 1+Wa, H, W)
    output = output.reshape(-1, *output.shape[2:])        # (N*B, 1+Wa, H, W)
    return output, align_loss / batch_size


# ----------------------------------------------------------------------------
# Deterministic parameter init + example run
# ----------------------------------------------------------------------------
def init_params(key):
    k1, k2, k3, k4 = jax.random.split(key, 4)
    return {
        "w1": 0.1 * jax.random.normal(k1, (16, 3, 3, 3), jnp.float32),
        "b1": 0.01 * jax.random.normal(k2, (16,), jnp.float32),
        "w2": 0.1 * jax.random.normal(k3, (32, 16, 3, 3), jnp.float32),
        "b2": 0.01 * jax.random.normal(k4, (32,), jnp.float32),
    }


if __name__ == "__main__":
    key = jax.random.PRNGKey(0)
    k_img, k_qry, k_mask, k_params = jax.random.split(key, 4)

    n_ways, n_shots, B, H, W = 1, 2, 1, 16, 16
    n_queries = 1

    supp_imgs = jax.random.normal(k_img, (n_ways, n_shots, B, 3, H, W), jnp.float32)
    qry_imgs = jax.random.normal(k_qry, (n_queries, 3, H, W), jnp.float32)
    fore_mask = (jax.random.uniform(k_mask, (n_ways, n_shots, B, H, W)) > 0.5).astype(jnp.float32)
    back_mask = 1.0 - fore_mask

    params = init_params(k_params)

    fwd = jax.jit(functools.partial(panet_forward, training=True))
    output, align_loss = fwd(params, supp_imgs, fore_mask, back_mask, qry_imgs)
    jax.block_until_ready((output, align_loss))

    assert output.shape == (n_queries * B, 1 + n_ways, H, W), output.shape
    assert jnp.isfinite(output).all() and jnp.isfinite(align_loss)
    print("KERNEL_OK")
</pallas_src>

<mosaic_0001>
module attributes {stable_mosaic.version = 11 : i64} {
  func.func @_matmul_bias_relu_f32_kernel(%arg0: i32, %arg1: i32, %arg2: i32, %arg3: memref<32x256xbf16, #tpu.memory_space<vmem>>, %arg4: memref<256x128xbf16, #tpu.memory_space<vmem>>, %arg5: memref<1x128xf32, #tpu.memory_space<vmem>>, %arg6: memref<32x128xf32, #tpu.memory_space<vmem>>) attributes {dimension_semantics = [#tpu.dimension_semantics<parallel>, #tpu.dimension_semantics<parallel>, #tpu.dimension_semantics<arbitrary>], iteration_bounds = array<i64: 2, 1, 1>, scalar_prefetch = 0 : i64, scratch_operands = 0 : i64, tpu.core_type = #tpu.core_type<tc>, window_params = [{transform_indices = @transform_0, window_bounds = array<i64: 32, 256>}, {transform_indices = @transform_1, window_bounds = array<i64: 256, 128>}, {transform_indices = @transform_2, window_bounds = array<i64: 1, 128>}, {transform_indices = @transform_3, window_bounds = array<i64: 32, 128>}]} {
    %c0_i32 = arith.constant 0 : i32
    %0 = arith.cmpi eq, %arg2, %c0_i32 : i32
    %1 = arith.extui %0 : i1 to i32
    %c0_i32_0 = arith.constant 0 : i32
    %2 = arith.cmpi ne, %1, %c0_i32_0 : i32
    scf.if %2 {
      %cst_10 = arith.constant 0.000000e+00 : f32
      %12 = vector.broadcast %cst_10 : f32 to vector<32x128xf32>
      %c0_11 = arith.constant 0 : index
      %c0_12 = arith.constant 0 : index
      %13 = vector.load %arg6[%c0_11, %c0_12] : memref<32x128xf32, #tpu.memory_space<vmem>>, vector<32x128xf32>
      tpu.vector_store %arg6[%c0_11, %c0_12], %12 {strides = array<i32>} : memref<32x128xf32, #tpu.memory_space<vmem>>, vector<32x128xf32>,
    } else {
    }
    %c0 = arith.constant 0 : index
    %c0_1 = arith.constant 0 : index
    %3 = vector.load %arg6[%c0, %c0_1] : memref<32x128xf32, #tpu.memory_space<vmem>>, vector<32x128xf32>
    %c0_2 = arith.constant 0 : index
    %c0_3 = arith.constant 0 : index
    %4 = vector.load %arg3[%c0_2, %c0_3] : memref<32x256xbf16, #tpu.memory_space<vmem>>, vector<32x256xbf16>
    %c0_4 = arith.constant 0 : index
    %c0_5 = arith.constant 0 : index
    %5 = vector.load %arg4[%c0_4, %c0_5] : memref<256x128xbf16, #tpu.memory_space<vmem>>, vector<256x128xbf16>
    %cst = arith.constant dense<0.000000e+00> : vector<32x128xf32>
    %6 = tpu.matmul %4, %5, %cst {dimension_numbers = #tpu.dot_dimension_numbers<[1], [0], [0], [1], [0, 0, 1, 1], [], []>} : vector<32x256xbf16>, vector<256x128xbf16>, vector<32x128xf32> -> vector<32x128xf32>
    %7 = arith.addf %3, %6 : vector<32x128xf32>
    %c0_6 = arith.constant 0 : index
    %c0_7 = arith.constant 0 : index
    %8 = vector.load %arg6[%c0_6, %c0_7] : memref<32x128xf32, #tpu.memory_space<vmem>>, vector<32x128xf32>
    tpu.vector_store %arg6[%c0_6, %c0_7], %7 {strides = array<i32>} : memref<32x128xf32, #tpu.memory_space<vmem>>, vector<32x128xf32>,
    %c0_i32_8 = arith.constant 0 : i32
    %9 = arith.cmpi eq, %arg2, %c0_i32_8 : i32
    %10 = arith.extui %9 : i1 to i32
    %c0_i32_9 = arith.constant 0 : i32
    %11 = arith.cmpi ne, %10, %c0_i32_9 : i32
    scf.if %11 {
      %c0_10 = arith.constant 0 : index
      %c0_11 = arith.constant 0 : index
      %12 = vector.load %arg6[%c0_10, %c0_11] : memref<32x128xf32, #tpu.memory_space<vmem>>, vector<32x128xf32>
      %c0_12 = arith.constant 0 : index
      %c0_13 = arith.constant 0 : index
      %13 = vector.load %arg5[%c0_12, %c0_13] : memref<1x128xf32, #tpu.memory_space<vmem>>, vector<1x128xf32>
      %14 = vector.broadcast %13 : vector<1x128xf32> to vector<32x128xf32>
      %15 = arith.addf %12, %14 : vector<32x128xf32>
      %cst_14 = arith.constant 0.000000e+00 : f32
      %16 = vector.broadcast %cst_14 : f32 to vector<32x128xf32>
      %17 = arith.maximumf %15, %16 : vector<32x128xf32>
      %c0_15 = arith.constant 0 : index
      %c0_16 = arith.constant 0 : index
      %18 = vector.load %arg6[%c0_15, %c0_16] : memref<32x128xf32, #tpu.memory_space<vmem>>, vector<32x128xf32>
      tpu.vector_store %arg6[%c0_15, %c0_16], %17 {strides = array<i32>} : memref<32x128xf32, #tpu.memory_space<vmem>>, vector<32x128xf32>,
    } else {
    }
    return
  }
  func.func @transform_0(%arg0: i32, %arg1: i32, %arg2: i32) -> (i32, i32) {
    %c0_i32 = arith.constant 0 : i32
    return %arg0, %arg2 : i32, i32
  }
  func.func @transform_1(%arg0: i32, %arg1: i32, %arg2: i32) -> (i32, i32) {
    %c0_i32 = arith.constant 0 : i32
    return %arg2, %arg1 : i32, i32
  }
  func.func @transform_2(%arg0: i32, %arg1: i32, %arg2: i32) -> (i32, i32) {
    %c0_i32 = arith.constant 0 : i32
    %c0_i32_0 = arith.constant 0 : i32
    return %c0_i32, %arg1 : i32, i32
  }
  func.func @transform_3(%arg0: i32, %arg1: i32, %arg2: i32) -> (i32, i32) {
    %c0_i32 = arith.constant 0 : i32
    return %arg0, %arg1 : i32, i32
  }
}

module attributes {stable_mosaic.version = 11 : i64} {
  func.func @_masked_pool_kernel(%arg0: i32, %arg1: i32, %arg2: memref<1x256x128xf32, #tpu.memory_space<vmem>>, %arg3: memref<1x8x256xf32, #tpu.memory_space<vmem>>, %arg4: memref<1x8x1xf32, #tpu.memory_space<vmem>>, %arg5: memref<1x8x128xf32, #tpu.memory_space<vmem>>, %arg6: memref<8x128xf32, #tpu.memory_space<vmem>>) attributes {dimension_semantics = [#tpu.dimension_semantics<parallel>, #tpu.dimension_semantics<arbitrary>], iteration_bounds = array<i64: 2, 1>, scalar_prefetch = 0 : i64, scratch_operands = 1 : i64, tpu.core_type = #tpu.core_type<tc>, window_params = [{transform_indices = @transform_0, window_bounds = array<i64: 1, 256, 128>}, {transform_indices = @transform_1, window_bounds = array<i64: 1, 8, 256>}, {transform_indices = @transform_2, window_bounds = array<i64: 1, 8, 1>}, {transform_indices = @transform_3, window_bounds = array<i64: 1, 8, 128>}]} {
    %c0_i32 = arith.constant 0 : i32
    %0 = arith.cmpi eq, %arg1, %c0_i32 : i32
    %1 = arith.extui %0 : i1 to i32
    %c0_i32_0 = arith.constant 0 : i32
    %2 = arith.cmpi ne, %1, %c0_i32_0 : i32
    scf.if %2 {
      %cst_12 = arith.constant 0.000000e+00 : f32
      %14 = vector.broadcast %cst_12 : f32 to vector<8x128xf32>
      %c0_13 = arith.constant 0 : index
      %c0_14 = arith.constant 0 : index
      %15 = vector.load %arg6[%c0_13, %c0_14] : memref<8x128xf32, #tpu.memory_space<vmem>>, vector<8x128xf32>
      tpu.vector_store %arg6[%c0_13, %c0_14], %14 {strides = array<i32>} : memref<8x128xf32, #tpu.memory_space<vmem>>, vector<8x128xf32>,
    } else {
    }
    %c0 = arith.constant 0 : index
    %c0_1 = arith.constant 0 : index
    %3 = vector.load %arg6[%c0, %c0_1] : memref<8x128xf32, #tpu.memory_space<vmem>>, vector<8x128xf32>
    %c0_2 = arith.constant 0 : index
    %c0_3 = arith.constant 0 : index
    %c0_4 = arith.constant 0 : index
    %4 = vector.load %arg3[%c0_2, %c0_3, %c0_4] : memref<1x8x256xf32, #tpu.memory_space<vmem>>, vector<1x8x256xf32>
    %5 = vector.shape_cast %4 : vector<1x8x256xf32> to vector<8x256xf32>
    %c0_5 = arith.constant 0 : index
    %c0_6 = arith.constant 0 : index
    %c0_7 = arith.constant 0 : index
    %6 = vector.load %arg2[%c0_5, %c0_6, %c0_7] : memref<1x256x128xf32, #tpu.memory_space<vmem>>, vector<1x256x128xf32>
    %7 = vector.shape_cast %6 : vector<1x256x128xf32> to vector<256x128xf32>
    %cst = arith.constant dense<0.000000e+00> : vector<8x128xf32>
    %8 = tpu.matmul %5, %7, %cst {dimension_numbers = #tpu.dot_dimension_numbers<[1], [0], [0], [1], [0, 0, 1, 1], [], []>} : vector<8x256xf32>, vector<256x128xf32>, vector<8x128xf32> -> vector<8x128xf32>
    %9 = arith.addf %3, %8 : vector<8x128xf32>
    %c0_8 = arith.constant 0 : index
    %c0_9 = arith.constant 0 : index
    %10 = vector.load %arg6[%c0_8, %c0_9] : memref<8x128xf32, #tpu.memory_space<vmem>>, vector<8x128xf32>
    tpu.vector_store %arg6[%c0_8, %c0_9], %9 {strides = array<i32>} : memref<8x128xf32, #tpu.memory_space<vmem>>, vector<8x128xf32>,
    %c0_i32_10 = arith.constant 0 : i32
    %11 = arith.cmpi eq, %arg1, %c0_i32_10 : i32
    %12 = arith.extui %11 : i1 to i32
    %c0_i32_11 = arith.constant 0 : i32
    %13 = arith.cmpi ne, %12, %c0_i32_11 : i32
    scf.if %13 {
      %c0_12 = arith.constant 0 : index
      %c0_13 = arith.constant 0 : index
      %14 = vector.load %arg6[%c0_12, %c0_13] : memref<8x128xf32, #tpu.memory_space<vmem>>, vector<8x128xf32>
      %c0_14 = arith.constant 0 : index
      %c0_15 = arith.constant 0 : index
      %c0_16 = arith.constant 0 : index
      %15 = vector.load %arg4[%c0_14, %c0_15, %c0_16] : memref<1x8x1xf32, #tpu.memory_space<vmem>>, vector<1x8x1xf32>
      %16 = vector.shape_cast %15 : vector<1x8x1xf32> to vector<8x1xf32>
      %17 = vector.broadcast %16 : vector<8x1xf32> to vector<8x128xf32>
      %18 = arith.mulf %14, %17 : vector<8x128xf32>
      %c0_17 = arith.constant 0 : index
      %c0_18 = arith.constant 0 : index
      %c0_19 = arith.constant 0 : index
      %19 = vector.load %arg5[%c0_17, %c0_18, %c0_19] : memref<1x8x128xf32, #tpu.memory_space<vmem>>, vector<1x8x128xf32>
      %20 = vector.shape_cast %19 : vector<1x8x128xf32> to vector<8x128xf32>
      %21 = vector.shape_cast %18 : vector<8x128xf32> to vector<1x8x128xf32>
      tpu.vector_store %arg5[%c0_17, %c0_18, %c0_19], %21 {strides = array<i32>} : memref<1x8x128xf32, #tpu.memory_space<vmem>>, vector<1x8x128xf32>,
    } else {
    }
    return
  }
  func.func @transform_0(%arg0: i32, %arg1: i32) -> (i32, i32, i32) {
    %c0_i32 = arith.constant 0 : i32
    %c0_i32_0 = arith.constant 0 : i32
    return %arg0, %arg1, %c0_i32 : i32, i32, i32
  }
  func.func @transform_1(%arg0: i32, %arg1: i32) -> (i32, i32, i32) {
    %c0_i32 = arith.constant 0 : i32
    %c0_i32_0 = arith.constant 0 : i32
    return %arg0, %c0_i32, %arg1 : i32, i32, i32
  }
  func.func @transform_2(%arg0: i32, %arg1: i32) -> (i32, i32, i32) {
    %c0_i32 = arith.constant 0 : i32
    %c0_i32_0 = arith.constant 0 : i32
    %c0_i32_1 = arith.constant 0 : i32
    return %arg0, %c0_i32, %c0_i32_0 : i32, i32, i32
  }
  func.func @transform_3(%arg0: i32, %arg1: i32) -> (i32, i32, i32) {
    %c0_i32 = arith.constant 0 : i32
    %c0_i32_0 = arith.constant 0 : i32
    %c0_i32_1 = arith.constant 0 : i32
    return %arg0, %c0_i32, %c0_i32_0 : i32, i32, i32
  }
}

module attributes {stable_mosaic.version = 11 : i64} {
  func.func @_cos_dist_kernel(%arg0: i32, %arg1: memref<8x32xf32, #tpu.memory_space<vmem>>, %arg2: memref<32x128xf32, #tpu.memory_space<vmem>>, %arg3: memref<8x1xf32, #tpu.memory_space<vmem>>, %arg4: memref<1x128xf32, #tpu.memory_space<vmem>>, %arg5: memref<8x128xf32, #tpu.memory_space<vmem>>) attributes {dimension_semantics = [#tpu.dimension_semantics<parallel>], iteration_bounds = array<i64: 1>, scalar_prefetch = 0 : i64, scratch_operands = 0 : i64, tpu.core_type = #tpu.core_type<tc>, window_params = [{pipeline_mode = #tpu.pipeline_mode<synchronous>, transform_indices = @transform_0, window_bounds = array<i64: 8, 32>}, {transform_indices = @transform_1, window_bounds = array<i64: 32, 128>}, {pipeline_mode = #tpu.pipeline_mode<synchronous>, transform_indices = @transform_2, window_bounds = array<i64: 8, 1>}, {transform_indices = @transform_3, window_bounds = array<i64: 1, 128>}, {transform_indices = @transform_4, window_bounds = array<i64: 8, 128>}]} {
    %c0 = arith.constant 0 : index
    %c0_0 = arith.constant 0 : index
    %0 = vector.load %arg1[%c0, %c0_0] : memref<8x32xf32, #tpu.memory_space<vmem>>, vector<8x32xf32>
    %c0_1 = arith.constant 0 : index
    %c0_2 = arith.constant 0 : index
    %1 = vector.load %arg2[%c0_1, %c0_2] : memref<32x128xf32, #tpu.memory_space<vmem>>, vector<32x128xf32>
    %cst = arith.constant dense<0.000000e+00> : vector<8x128xf32>
    %2 = tpu.matmul %0, %1, %cst {dimension_numbers = #tpu.dot_dimension_numbers<[1], [0], [0], [1], [0, 0, 1, 1], [], []>} : vector<8x32xf32>, vector<32x128xf32>, vector<8x128xf32> -> vector<8x128xf32>
    %c0_3 = arith.constant 0 : index
    %c0_4 = arith.constant 0 : index
    %3 = vector.load %arg4[%c0_3, %c0_4] : memref<1x128xf32, #tpu.memory_space<vmem>>, vector<1x128xf32>
    %cst_5 = arith.constant 0.000000e+00 : f32
    %4 = vector.broadcast %cst_5 : f32 to vector<1x128xf32>
    %5 = arith.maximumf %3, %4 : vector<1x128xf32>
    %6 = math.rsqrt %5 : vector<1x128xf32>
    %cst_6 = arith.constant 1.000000e+08 : f32
    %7 = vector.broadcast %cst_6 : f32 to vector<1x128xf32>
    %8 = arith.minimumf %6, %7 : vector<1x128xf32>
    %c0_7 = arith.constant 0 : index
    %c0_8 = arith.constant 0 : index
    %9 = vector.load %arg3[%c0_7, %c0_8] : memref<8x1xf32, #tpu.memory_space<vmem>>, vector<8x1xf32>
    %cst_9 = arith.constant 0.000000e+00 : f32
    %10 = vector.broadcast %cst_9 : f32 to vector<8x1xf32>
    %11 = arith.maximumf %9, %10 : vector<8x1xf32>
    %12 = math.rsqrt %11 : vector<8x1xf32>
    %cst_10 = arith.constant 1.000000e+08 : f32
    %13 = vector.broadcast %cst_10 : f32 to vector<8x1xf32>
    %14 = arith.minimumf %12, %13 : vector<8x1xf32>
    %cst_11 = arith.constant 2.000000e+01 : f32
    %15 = vector.broadcast %cst_11 : f32 to vector<8x1xf32>
    %16 = arith.mulf %15, %14 : vector<8x1xf32>
    %17 = vector.broadcast %8 : vector<1x128xf32> to vector<8x128xf32>
    %18 = vector.broadcast %16 : vector<8x1xf32> to vector<8x128xf32>
    %19 = arith.mulf %17, %18 : vector<8x128xf32>
    %20 = arith.mulf %2, %19 : vector<8x128xf32>
    %c0_12 = arith.constant 0 : index
    %c0_13 = arith.constant 0 : index
    %21 = vector.load %arg5[%c0_12, %c0_13] : memref<8x128xf32, #tpu.memory_space<vmem>>, vector<8x128xf32>
    tpu.vector_store %arg5[%c0_12, %c0_13], %20 {strides = array<i32>} : memref<8x128xf32, #tpu.memory_space<vmem>>, vector<8x128xf32>,
    return
  }
  func.func @transform_0(%arg0: i32) -> (i32, i32) {
    %c0_i32 = arith.constant 0 : i32
    %c0_i32_0 = arith.constant 0 : i32
    %c0_i32_1 = arith.constant 0 : i32
    return %c0_i32, %c0_i32_0 : i32, i32
  }
  func.func @transform_1(%arg0: i32) -> (i32, i32) {
    %c0_i32 = arith.constant 0 : i32
    %c0_i32_0 = arith.constant 0 : i32
    return %c0_i32, %arg0 : i32, i32
  }
  func.func @transform_2(%arg0: i32) -> (i32, i32) {
    %c0_i32 = arith.constant 0 : i32
    %c0_i32_0 = arith.constant 0 : i32
    %c0_i32_1 = arith.constant 0 : i32
    return %c0_i32, %c0_i32_0 : i32, i32
  }
  func.func @transform_3(%arg0: i32) -> (i32, i32) {
    %c0_i32 = arith.constant 0 : i32
    %c0_i32_0 = arith.constant 0 : i32
    return %c0_i32, %arg0 : i32, i32
  }
  func.func @transform_4(%arg0: i32) -> (i32, i32) {
    %c0_i32 = arith.constant 0 : i32
    %c0_i32_0 = arith.constant 0 : i32
    return %c0_i32, %arg0 : i32, i32
  }
}

module attributes {stable_mosaic.version = 11 : i64} {
  func.func @_masked_pool_kernel(%arg0: i32, %arg1: i32, %arg2: memref<1x128x128xf32, #tpu.memory_space<vmem>>, %arg3: memref<1x8x128xf32, #tpu.memory_space<vmem>>, %arg4: memref<1x8x1xf32, #tpu.memory_space<vmem>>, %arg5: memref<1x8x128xf32, #tpu.memory_space<vmem>>, %arg6: memref<8x128xf32, #tpu.memory_space<vmem>>) attributes {dimension_semantics = [#tpu.dimension_semantics<parallel>, #tpu.dimension_semantics<arbitrary>], iteration_bounds = array<i64: 1, 1>, scalar_prefetch = 0 : i64, scratch_operands = 1 : i64, tpu.core_type = #tpu.core_type<tc>, window_params = [{transform_indices = @transform_0, window_bounds = array<i64: 1, 128, 128>}, {transform_indices = @transform_1, window_bounds = array<i64: 1, 8, 128>}, {transform_indices = @transform_2, window_bounds = array<i64: 1, 8, 1>}, {transform_indices = @transform_3, window_bounds = array<i64: 1, 8, 128>}]} {
    %c0_i32 = arith.constant 0 : i32
    %0 = arith.cmpi eq, %arg1, %c0_i32 : i32
    %1 = arith.extui %0 : i1 to i32
    %c0_i32_0 = arith.constant 0 : i32
    %2 = arith.cmpi ne, %1, %c0_i32_0 : i32
    scf.if %2 {
      %cst_12 = arith.constant 0.000000e+00 : f32
      %14 = vector.broadcast %cst_12 : f32 to vector<8x128xf32>
      %c0_13 = arith.constant 0 : index
      %c0_14 = arith.constant 0 : index
      %15 = vector.load %arg6[%c0_13, %c0_14] : memref<8x128xf32, #tpu.memory_space<vmem>>, vector<8x128xf32>
      tpu.vector_store %arg6[%c0_13, %c0_14], %14 {strides = array<i32>} : memref<8x128xf32, #tpu.memory_space<vmem>>, vector<8x128xf32>,
    } else {
    }
    %c0 = arith.constant 0 : index
    %c0_1 = arith.constant 0 : index
    %3 = vector.load %arg6[%c0, %c0_1] : memref<8x128xf32, #tpu.memory_space<vmem>>, vector<8x128xf32>
    %c0_2 = arith.constant 0 : index
    %c0_3 = arith.constant 0 : index
    %c0_4 = arith.constant 0 : index
    %4 = vector.load %arg3[%c0_2, %c0_3, %c0_4] : memref<1x8x128xf32, #tpu.memory_space<vmem>>, vector<1x8x128xf32>
    %5 = vector.shape_cast %4 : vector<1x8x128xf32> to vector<8x128xf32>
    %c0_5 = arith.constant 0 : index
    %c0_6 = arith.constant 0 : index
    %c0_7 = arith.constant 0 : index
    %6 = vector.load %arg2[%c0_5, %c0_6, %c0_7] : memref<1x128x128xf32, #tpu.memory_space<vmem>>, vector<1x128x128xf32>
    %7 = vector.shape_cast %6 : vector<1x128x128xf32> to vector<128x128xf32>
    %cst = arith.constant dense<0.000000e+00> : vector<8x128xf32>
    %8 = tpu.matmul %5, %7, %cst {dimension_numbers = #tpu.dot_dimension_numbers<[1], [0], [0], [1], [0, 0, 1, 1], [], []>} : vector<8x128xf32>, vector<128x128xf32>, vector<8x128xf32> -> vector<8x128xf32>
    %9 = arith.addf %3, %8 : vector<8x128xf32>
    %c0_8 = arith.constant 0 : index
    %c0_9 = arith.constant 0 : index
    %10 = vector.load %arg6[%c0_8, %c0_9] : memref<8x128xf32, #tpu.memory_space<vmem>>, vector<8x128xf32>
    tpu.vector_store %arg6[%c0_8, %c0_9], %9 {strides = array<i32>} : memref<8x128xf32, #tpu.memory_space<vmem>>, vector<8x128xf32>,
    %c0_i32_10 = arith.constant 0 : i32
    %11 = arith.cmpi eq, %arg1, %c0_i32_10 : i32
    %12 = arith.extui %11 : i1 to i32
    %c0_i32_11 = arith.constant 0 : i32
    %13 = arith.cmpi ne, %12, %c0_i32_11 : i32
    scf.if %13 {
      %c0_12 = arith.constant 0 : index
      %c0_13 = arith.constant 0 : index
      %14 = vector.load %arg6[%c0_12, %c0_13] : memref<8x128xf32, #tpu.memory_space<vmem>>, vector<8x128xf32>
      %c0_14 = arith.constant 0 : index
      %c0_15 = arith.constant 0 : index
      %c0_16 = arith.constant 0 : index
      %15 = vector.load %arg4[%c0_14, %c0_15, %c0_16] : memref<1x8x1xf32, #tpu.memory_space<vmem>>, vector<1x8x1xf32>
      %16 = vector.shape_cast %15 : vector<1x8x1xf32> to vector<8x1xf32>
      %17 = vector.broadcast %16 : vector<8x1xf32> to vector<8x128xf32>
      %18 = arith.mulf %14, %17 : vector<8x128xf32>
      %c0_17 = arith.constant 0 : index
      %c0_18 = arith.constant 0 : index
      %c0_19 = arith.constant 0 : index
      %19 = vector.load %arg5[%c0_17, %c0_18, %c0_19] : memref<1x8x128xf32, #tpu.memory_space<vmem>>, vector<1x8x128xf32>
      %20 = vector.shape_cast %19 : vector<1x8x128xf32> to vector<8x128xf32>
      %21 = vector.shape_cast %18 : vector<8x128xf32> to vector<1x8x128xf32>
      tpu.vector_store %arg5[%c0_17, %c0_18, %c0_19], %21 {strides = array<i32>} : memref<1x8x128xf32, #tpu.memory_space<vmem>>, vector<1x8x128xf32>,
    } else {
    }
    return
  }
  func.func @transform_0(%arg0: i32, %arg1: i32) -> (i32, i32, i32) {
    %c0_i32 = arith.constant 0 : i32
    %c0_i32_0 = arith.constant 0 : i32
    return %arg0, %arg1, %c0_i32 : i32, i32, i32
  }
  func.func @transform_1(%arg0: i32, %arg1: i32) -> (i32, i32, i32) {
    %c0_i32 = arith.constant 0 : i32
    %c0_i32_0 = arith.constant 0 : i32
    return %arg0, %c0_i32, %arg1 : i32, i32, i32
  }
  func.func @transform_2(%arg0: i32, %arg1: i32) -> (i32, i32, i32) {
    %c0_i32 = arith.constant 0 : i32
    %c0_i32_0 = arith.constant 0 : i32
    %c0_i32_1 = arith.constant 0 : i32
    return %arg0, %c0_i32, %c0_i32_0 : i32, i32, i32
  }
  func.func @transform_3(%arg0: i32, %arg1: i32) -> (i32, i32, i32) {
    %c0_i32 = arith.constant 0 : i32
    %c0_i32_0 = arith.constant 0 : i32
    %c0_i32_1 = arith.constant 0 : i32
    return %arg0, %c0_i32, %c0_i32_0 : i32, i32, i32
  }
}

</mosaic_0001>

<llo_original>
// kernel: panet_forward.6
$region0: #{panet_forward.6}
  #allocation0 [shape = 'u32[]', space=smem, size = 0x4, offset = 0x4, fixed_abs, tag = 'smem constant byte address 0x4 - core index']
  #allocation1 [shape = 'u32[144,128]{1,0:T(1,128)}', space=vmem, size = 0x12000, scoped, tag = 'internal scratch']
  %s0 = inlined_call_operand.vmem [shape: bf16[64,256], index: 0, kind: input, shape index: {}]
  %s1 = inlined_call_operand.vmem [shape: bf16[256,128], index: 1, kind: input, shape index: {}]
  %s2 = inlined_call_operand.vmem [shape: f32[1,128], index: 2, kind: input, shape index: {}]
  %s3 = inlined_call_operand.vmem [shape: f32[64,128], index: 3, kind: output, shape index: {}]
  %s4 = sld [smem:[#allocation0]]
  $region53: #{panet_forward.6} parent=0
    _
  %s6 = ssub.s32 1, %s4
  %s7 = scalar_select 0, %s6, %s4
  loop: start=0, step=1, limit=4
  $region2: #{panet_forward.6} parent=0 // loop_pre_header
    _
  $region3: #{panet_forward.6} parent=0 // loop_header
    %s9 = sphi 0, %s13
    %p10 = scmp.ge.s32.totalorder %s9, 4
    %s16 = sphi 0, %s35
    %s17 = sphi 0, %s31
    %s18 = sphi 0, %s27
    %s19 = sphi 0, %s16
    %s20 = sphi 0, %s17
    %s21 = sphi 0, %s18
    %s22 = sphi 0, %s19
    %s23 = sphi 0, %s20
    %s24 = sphi 0, %s21
    %s40 = sphi 0, %s42
    %s43 = sphi 0, %s40
    %s44 = sphi 0, %s43
    %s60 = sphi 0, %s44
    %s68 = sphi 0, %s70
    %s71 = sphi 0, %s68
    %s72 = sphi 0, %s71
    %s88 = sphi 0, %s72
    %s94 = sphi 0, %s96
    %s97 = sphi 0, %s94
    %s98 = sphi 0, %s97
    %s114 = sphi 0, %s98
    %s122 = sphi 0, %s124
    %s125 = sphi 0, %s122
    %s126 = sphi 0, %s125
    %s142 = sphi 0, %s126
  $region4: #{panet_forward.6} parent=0 // loop_header_branch
    %12 = sbr.rel (%p10) target = $region8
  $region5: #{panet_forward.6} parent=0 // loop_body
    %s14 = ssub.s32 %s9, 1
    %s15 = ssub.s32 %s9, 2
    %s25 = sadd.s32 1, %s18
    %p26 = scmp.ge.s32.totalorder %s25, 1
    %s27 = scalar_select %p26, 0, %s25
    %s28 = sadd.s32 1, %s17
    %s29 = scalar_select %p26, %s28, %s17
    %p30 = scmp.ge.s32.totalorder %s29, 1
    %s31 = scalar_select %p30, 0, %s29
    %s32 = sadd.s32 1, %s16
    %s33 = scalar_select %p30, %s32, %s16
    %p34 = scmp.ge.s32.totalorder %s33, 2
    %s35 = scalar_select %p34, 0, %s33
    %s36 = ssub.s32 %s16, %s35
    %s37 = ssub.s32 %s18, %s27
    %s38 = sor.u32 %s36, %s37
    %p39 = scmp.eq.s32.totalorder %s38, 0
    %s41 = sadd.s32 %s40, 1
    %s42 = scalar_select %p39, %s40, %s41
    %p45 = pneg %p39
    %p46 = scmp.eq.s32.totalorder %s9, 1
    %p47 = por %p45, %p46
    %p48 = scmp.ne.s32.totalorder %s40, %s43
    %p49 = scmp.eq.s32.totalorder %s9, 0
    %p50 = por %p48, %p49
    %p51 = scmp.ne.s32.totalorder %s40, %s43
    %p52 = scmp.eq.s32.totalorder %s14, 1
    %p53 = por %p51, %p52
    %p54 = scmp.ne.s32.totalorder %s43, %s44
    %p55 = scmp.eq.s32.totalorder %s14, 0
    %p56 = por %p54, %p55
    %p57 = scmp.ne.s32.totalorder %s43, %s44
    %p58 = scmp.eq.s32.totalorder %s15, 1
    %p59 = por %p57, %p58
    %p61 = scmp.ne.s32.totalorder %s44, %s60
    %p62 = scmp.eq.s32.totalorder %s15, 0
    %p63 = por %p61, %p62
    %s64 = ssub.s32 %s18, %s27
    %s65 = ssub.s32 %s17, %s31
    %s66 = sor.u32 %s64, %s65
    %p67 = scmp.eq.s32.totalorder %s66, 0
    %s69 = sadd.s32 %s68, 1
    %s70 = scalar_select %p67, %s68, %s69
    %p73 = pneg %p67
    %p74 = scmp.eq.s32.totalorder %s9, 1
    %p75 = por %p73, %p74
    %p76 = scmp.ne.s32.totalorder %s68, %s71
    %p77 = scmp.eq.s32.totalorder %s9, 0
    %p78 = por %p76, %p77
    %p79 = scmp.ne.s32.totalorder %s68, %s71
    %p80 = scmp.eq.s32.totalorder %s14, 1
    %p81 = por %p79, %p80
    %p82 = scmp.ne.s32.totalorder %s71, %s72
    %p83 = scmp.eq.s32.totalorder %s14, 0
    %p84 = por %p82, %p83
    %p85 = scmp.ne.s32.totalorder %s71, %s72
    %p86 = scmp.eq.s32.totalorder %s15, 1
    %p87 = por %p85, %p86
    %p89 = scmp.ne.s32.totalorder %s72, %s88
    %p90 = scmp.eq.s32.totalorder %s15, 0
    %p91 = por %p89, %p90
    %s92 = ssub.s32 %s17, %s31
    %p93 = scmp.eq.s32.totalorder %s92, 0
    %s95 = sadd.s32 %s94, 1
    %s96 = scalar_select %p93, %s94, %s95
    %p99 = pneg %p93
    %p100 = scmp.eq.s32.totalorder %s9, 1
    %p101 = por %p99, %p100
    %p102 = scmp.ne.s32.totalorder %s94, %s97
    %p103 = scmp.eq.s32.totalorder %s9, 0
    %p104 = por %p102, %p103
    %p105 = scmp.ne.s32.totalorder %s94, %s97
    %p106 = scmp.eq.s32.totalorder %s14, 1
    %p107 = por %p105, %p106
    %p108 = scmp.ne.s32.totalorder %s97, %s98
    %p109 = scmp.eq.s32.totalorder %s14, 0
    %p110 = por %p108, %p109
    %p111 = scmp.ne.s32.totalorder %s97, %s98
    %p112 = scmp.eq.s32.totalorder %s15, 1
    %p113 = por %p111, %p112
    %p115 = scmp.ne.s32.totalorder %s98, %s114
    %p116 = scmp.eq.s32.totalorder %s15, 0
    %p117 = por %p115, %p116
    %s118 = ssub.s32 %s16, %s35
    %s119 = ssub.s32 %s17, %s31
    %s120 = sor.u32 %s118, %s119
    %p121 = scmp.eq.s32.totalorder %s120, 0
    %s123 = sadd.s32 %s122, 1
    %s124 = scalar_select %p121, %s122, %s123
    %p127 = pneg %p121
    %p128 = scmp.eq.s32.totalorder %s9, 1
    %p129 = por %p127, %p128
    %p130 = scmp.ne.s32.totalorder %s122, %s125
    %p131 = scmp.eq.s32.totalorder %s9, 0
    %p132 = por %p130, %p131
    %p133 = scmp.ne.s32.totalorder %s122, %s125
    %p134 = scmp.eq.s32.totalorder %s14, 1
    %p135 = por %p133, %p134
    %p136 = scmp.ne.s32.totalorder %s125, %s126
    %p137 = scmp.eq.s32.totalorder %s14, 0
    %p138 = por %p136, %p137
    %p139 = scmp.ne.s32.totalorder %s125, %s126
    %p140 = scmp.eq.s32.totalorder %s15, 1
    %p141 = por %p139, %p140
    %p143 = scmp.ne.s32.totalorder %s126, %s142
    %p144 = scmp.eq.s32.totalorder %s15, 0
    %p145 = por %p143, %p144
    %p146 = scmp.le.s32.totalorder 1, %s9
    %p147 = scmp.lt.s32.totalorder %s9, 3
    %p148 = pnand %p146, %p147
    %p149 = pneg %p148
    // Predicated region
    $region9: #{panet_forward.6} parent=5 // pred_check
      _
    $region10: #{panet_forward.6} parent=5 // pred_check_branch
      %151 = sbr.rel (%p148) target = $region12
    $region11: #{panet_forward.6} parent=5 // pred_region
      %s152 = ssub.s32 %s9, 1
      // Predicated region
      $region13: #{panet_forward.6} parent=11 // pred_check
        %p153 = pneg %p84
      $region14: #{panet_forward.6} parent=11 // pred_check_branch
        %155 = sbr.rel (%p153) target = $region16
      $region15: #{panet_forward.6} parent=11 // pred_region
        %s156 = smul.u32 32, %s21
        %p157 = scmp.lt.s32.totalorder %s156, 31
        %s158 = scalar_select %p157, %s156, 31
        %p159 = scmp.lt.s32.totalorder %s20, 0
        %s160 = scalar_select %p159, %s20, 0
        %s161 = sadd.s32 %s160, %s158
        %s162 = smul.addr %s161, 4
        %s163 = scalar_lea.vmem %s1, %s162
        %s164 = smul.u32 32, %s21
      $region16: #{panet_forward.6} parent=11 // pred_fallthru
        _
      // Predicated region
      $region17: #{panet_forward.6} parent=11 // pred_check
        %p165 = pneg %p110
      $region18: #{panet_forward.6} parent=11 // pred_check_branch
        %167 = sbr.rel (%p165) target = $region20
      $region19: #{panet_forward.6} parent=11 // pred_region
        %p168 = scmp.lt.s32.totalorder %s20, 0
        %s169 = scalar_select %p168, %s20, 0
        %s170 = scalar_lea.vmem %s2, %s169
      $region20: #{panet_forward.6} parent=11 // pred_fallthru
        _
    $region12: #{panet_forward.6} parent=5 // pred_fallthru
      _
    %p171 = scmp.lt.s32.totalorder %s9, 2
    // Predicated region
    $region21: #{panet_forward.6} parent=5 // pred_check
      %p172 = pneg %p171
    $region22: #{panet_forward.6} parent=5 // pred_check_branch
      %174 = sbr.rel (%p172) target = $region24
    $region23: #{panet_forward.6} parent=5 // pred_region
      // Predicated region
      $region25: #{panet_forward.6} parent=23 // pred_check
        %p175 = pneg %p50
      $region26: #{panet_forward.6} parent=23 // pred_check_branch
        %177 = sbr.rel (%p175) target = $region28
      $region27: #{panet_forward.6} parent=23 // pred_region
        %s178 = smul.u32 4, %s16
        %s179 = smul.u32 2, %s18
        %p180 = scmp.lt.s32.totalorder %s178, 7
        %s181 = scalar_select %p180, %s178, 7
        %p182 = scmp.lt.s32.totalorder %s179, 1
        %s183 = scalar_select %p182, %s179, 1
        %s184 = smul.addr %s181, 2
        %s185 = sadd.s32 %s183, %s184
        %s186 = smul.addr %s185, 4
        %s187 = scalar_lea.vmem %s0, %s186
        %s188 = smul.u32 4, %s16
        %s189 = smul.u32 2, %s18
      $region28: #{panet_forward.6} parent=23 // pred_fallthru
        _
    $region24: #{panet_forward.6} parent=5 // pred_fallthru
      _
    %p190 = scmp.le.s32.totalorder 1, %s9
    %p191 = scmp.lt.s32.totalorder %s9, 3
    %p192 = pnand %p190, %p191
    %p193 = pneg %p192
    // Predicated region
    $region29: #{panet_forward.6} parent=5 // pred_check
      _
    $region30: #{panet_forward.6} parent=5 // pred_check_branch
      %195 = sbr.rel (%p192) target = $region32
    $region31: #{panet_forward.6} parent=5 // pred_region
      %s196 = ssub.s32 %s9, 1
      %s197 = smul.u32 4, %s19
      %s198 = smul.u32 2, %s21
      %p199 = scmp.lt.s32.totalorder %s197, 7
      %s200 = scalar_select %p199, %s197, 7
      %p201 = scmp.lt.s32.totalorder %s198, 1
      %s202 = scalar_select %p201, %s198, 1
      %s203 = smul.addr %s200, 2
      %s204 = sadd.s32 %s202, %s203
      %s205 = smul.addr %s204, 4
      %s206 = scalar_lea.vmem %s0, %s205
      %p207 = pneg %p56
      %p208 = pneg %p53
      %s209 = smul.u32 32, %s21
      %p210 = scmp.lt.s32.totalorder %s209, 31
      %s211 = scalar_select %p210, %s209, 31
      %p212 = scmp.lt.s32.totalorder %s20, 0
      %s213 = scalar_select %p212, %s20, 0
      %s214 = sadd.s32 %s213, %s211
      %s215 = smul.addr %s214, 4
      %s216 = scalar_lea.vmem %s1, %s215
      %p217 = pneg %p84
      %p218 = pneg %p81
      %p219 = scmp.lt.s32.totalorder %s20, 0
      %s220 = scalar_select %p219, %s20, 0
      %s221 = scalar_lea.vmem %s2, %s220
      %p222 = pneg %p110
      %p223 = pneg %p107
      %p224 = pneg %p138
      %p225 = pneg %p135
      %s226 = smul.u32 4, %s19
      %p227 = scmp.lt.s32.totalorder %s226, 7
      %s228 = scalar_select %p227, %s226, 7
      %p229 = scmp.lt.s32.totalorder %s20, 0
      %s230 = scalar_select %p229, %s20, 0
      %s231 = sadd.s32 %s230, %s228
      %s232 = smul.addr %s231, 8
      %s233 = scalar_lea.vmem %s3, %s232
      %s234 = smul.u32 4, %s19
      %s235 = smul.u32 2, %s21
      %p236 = scmp.lt.s32.totalorder %s234, 7
      %s237 = scalar_select %p236, %s234, 7
      %p238 = scmp.lt.s32.totalorder %s235, 1
      %s239 = scalar_select %p238, %s235, 1
      %s240 = smul.addr %s237, 2
      %s241 = sadd.s32 %s239, %s240
      %s242 = smul.addr %s241, 4
      %s243 = scalar_lea.vmem %s0, %s242
      %s244 = smul.u32 4, %s19
      %s245 = smul.u32 2, %s21
      %s246 = smul.u32 32, %s21
      %p247 = scmp.lt.s32.totalorder %s246, 31
      %s248 = scalar_select %p247, %s246, 31
      %p249 = scmp.lt.s32.totalorder %s20, 0
      %s250 = scalar_select %p249, %s20, 0
      %s251 = sadd.s32 %s250, %s248
      %s252 = smul.addr %s251, 4
      %s253 = scalar_lea.vmem %s1, %s252
      %s254 = smul.u32 32, %s21
      %p255 = scmp.lt.s32.totalorder %s20, 0
      %s256 = scalar_select %p255, %s20, 0
      %s257 = scalar_lea.vmem %s2, %s256
      %s258 = smul.u32 4, %s19
      %p259 = scmp.lt.s32.totalorder %s258, 7
      %s260 = scalar_select %p259, %s258, 7
      %p261 = scmp.lt.s32.totalorder %s20, 0
      %s262 = scalar_select %p261, %s20, 0
      %s263 = sadd.s32 %s262, %s260
      %s264 = smul.addr %s263, 8
      %s265 = scalar_lea.vmem %s3, %s264
      %s266 = smul.u32 4, %s19
      %p268 = scmp.eq.s32.totalorder %s21, 0
      // Predicated region
      $region33: #{panet_forward.6} parent=31 // pred_check
        %p269 = pneg %p268
      $region34: #{panet_forward.6} parent=31 // pred_check_branch
        %271 = sbr.rel (%p269) target = $region36
      $region35: #{panet_forward.6} parent=31 // pred_region
        %272 = vst [vmem:[%s265] sm:$0xff] 0.0
        %273 = vst [vmem:[%s265 + $0x8] sm:$0xff] 0.0
        %274 = vst [vmem:[%s265 + $0x10] sm:$0xff] 0.0
        %275 = vst [vmem:[%s265 + $0x18] sm:$0xff] 0.0
      $region36: #{panet_forward.6} parent=31 // pred_fallthru
        _
      %v276 = vld [vmem:[%s265] sm:$0xff]
      %v277 = vld [vmem:[%s265 + $0x8] sm:$0xff]
      %v278 = vld [vmem:[%s265 + $0x10] sm:$0xff]
      %v279 = vld [vmem:[%s265 + $0x18] sm:$0xff]
      %v280 = vld [vmem:[%s243] sm:$0xff]
      %v281 = vld [vmem:[%s243 + $0x8] sm:$0xff]
      %v282 = vld [vmem:[%s243 + $0x10] sm:$0xff]
      %v283 = vld [vmem:[%s243 + $0x18] sm:$0xff]
      %v284 = vld [vmem:[%s253] sm:$0xf]
      %v285 = vld [vmem:[%s253 + $0x4] sm:$0xf]
      %v286 = vld [vmem:[%s253 + $0x8] sm:$0xf]
      %v287 = vld [vmem:[%s253 + $0xc] sm:$0xf]
      %v288 = vld [vmem:[%s253 + $0x10] sm:$0xf]
      %v289 = vld [vmem:[%s253 + $0x14] sm:$0xf]
      %v290 = vld [vmem:[%s253 + $0x18] sm:$0xf]
      %v291 = vld [vmem:[%s253 + $0x1c] sm:$0xf]
      %v292 = vld [vmem:[%s253 + $0x20] sm:$0xf]
      %v293 = vld [vmem:[%s253 + $0x24] sm:$0xf]
      %v294 = vld [vmem:[%s253 + $0x28] sm:$0xf]
      %v295 = vld [vmem:[%s253 + $0x2c] sm:$0xf]
      %v296 = vld [vmem:[%s253 + $0x30] sm:$0xf]
      %v297 = vld [vmem:[%s253 + $0x34] sm:$0xf]
      %v298 = vld [vmem:[%s253 + $0x38] sm:$0xf]
      %v299 = vld [vmem:[%s253 + $0x3c] sm:$0xf]
      %v300 = vld [vmem:[%s253 + $0x40] sm:$0xf]
      %v301 = vld [vmem:[%s253 + $0x44] sm:$0xf]
      %v302 = vld [vmem:[%s253 + $0x48] sm:$0xf]
      %v303 = vld [vmem:[%s253 + $0x4c] sm:$0xf]
      %v304 = vld [vmem:[%s253 + $0x50] sm:$0xf]
      %v305 = vld [vmem:[%s253 + $0x54] sm:$0xf]
      %v306 = vld [vmem:[%s253 + $0x58] sm:$0xf]
      %v307 = vld [vmem:[%s253 + $0x5c] sm:$0xf]
      %v308 = vld [vmem:[%s253 + $0x60] sm:$0xf]
      %v309 = vld [vmem:[%s253 + $0x64] sm:$0xf]
      %v310 = vld [vmem:[%s253 + $0x68] sm:$0xf]
      %v311 = vld [vmem:[%s253 + $0x6c] sm:$0xf]
      %v312 = vld [vmem:[%s253 + $0x70] sm:$0xf]
      %v313 = vld [vmem:[%s253 + $0x74] sm:$0xf]
      %v314 = vld [vmem:[%s253 + $0x78] sm:$0xf]
      %v315 = vld [vmem:[%s253 + $0x7c] sm:$0xf]
      %v320 = vunpack.c.l.b16 %v280
      %v321 = vunpack.c.h.b16 %v280
      %v322 = vunpack.c.l.b16 %v281
      %v323 = vunpack.c.h.b16 %v281
      %v324 = vunpack.c.l.b16 %v282
      %v325 = vunpack.c.h.b16 %v282
      %v326 = vunpack.c.l.b16 %v283
      %v327 = vunpack.c.h.b16 %v283
      %v328 = vpack.c.b16 %v322, %v320
      %v329 = vpack.c.b16 %v323, %v321
      %v330 = vpack.c.b16 %v326, %v324
      %v331 = vpack.c.b16 %v327, %v325
      %v368 = vunpack.c.l.b16 %v284
      %v369 = vunpack.c.l.b16 %v285
      %v370 = vunpack.c.l.b16 %v286
      %v371 = vunpack.c.l.b16 %v287
      %v372 = vunpack.c.l.b16 %v288
      %v373 = vunpack.c.l.b16 %v289
      %v374 = vunpack.c.l.b16 %v290
      %v375 = vunpack.c.l.b16 %v291
      %v376 = vunpack.c.l.b16 %v292
      %v377 = vunpack.c.l.b16 %v293
      %v378 = vunpack.c.l.b16 %v294
      %v379 = vunpack.c.l.b16 %v295
      %v380 = vunpack.c.l.b16 %v296
      %v381 = vunpack.c.l.b16 %v297
      %v382 = vunpack.c.l.b16 %v298
      %v383 = vunpack.c.l.b16 %v299
      %v384 = vunpack.c.l.b16 %v300
      %v385 = vunpack.c.l.b16 %v301
      %v386 = vunpack.c.l.b16 %v302
      %v387 = vunpack.c.l.b16 %v303
      %v388 = vunpack.c.l.b16 %v304
      %v389 = vunpack.c.l.b16 %v305
      %v390 = vunpack.c.l.b16 %v306
      %v391 = vunpack.c.l.b16 %v307
      %v392 = vunpack.c.l.b16 %v308
      %v393 = vunpack.c.l.b16 %v309
      %v394 = vunpack.c.l.b16 %v310
      %v395 = vunpack.c.l.b16 %v311
      %v396 = vunpack.c.l.b16 %v312
      %v397 = vunpack.c.l.b16 %v313
      %v398 = vunpack.c.l.b16 %v314
      %v399 = vunpack.c.l.b16 %v315
      %v400 = vpack.c.b16 %v369, %v368
      %v401 = vpack.c.b16 %v371, %v370
      %v402 = vpack.c.b16 %v373, %v372
      %v403 = vpack.c.b16 %v375, %v374
      %v404 = vpack.c.b16 %v377, %v376
      %v405 = vpack.c.b16 %v379, %v378
      %v406 = vpack.c.b16 %v381, %v380
      %v407 = vpack.c.b16 %v383, %v382
      %v408 = vpack.c.b16 %v385, %v384
      %v409 = vpack.c.b16 %v387, %v386
      %v410 = vpack.c.b16 %v389, %v388
      %v411 = vpack.c.b16 %v391, %v390
      %v412 = vpack.c.b16 %v393, %v392
      %v413 = vpack.c.b16 %v395, %v394
      %v414 = vpack.c.b16 %v397, %v396
      %v415 = vpack.c.b16 %v399, %v398
      %432 = vmatprep.subr.bf16.mxu0 0
      %433 = vmatpush1.bf16.msra.mxu0 %v400
      %434 = vmatprep.subr.bf16.mxu0 0
      %435 = vmatpush1.bf16.msra.mxu0 %v401
      %436 = vmatprep.subr.bf16.mxu0 0
      %437 = vmatpush1.bf16.msra.mxu0 %v402
      %438 = vmatprep.subr.bf16.mxu0 0
      %439 = vmatpush1.bf16.msra.mxu0 %v403
      %440 = vmatprep.subr.bf16.mxu0 0
      %441 = vmatpush1.bf16.msra.mxu0 %v404
      %442 = vmatprep.subr.bf16.mxu0 0
      %443 = vmatpush1.bf16.msra.mxu0 %v405
      %444 = vmatprep.subr.bf16.mxu0 0
      %445 = vmatpush1.bf16.msra.mxu0 %v406
      %446 = vmatprep.subr.bf16.mxu0 0
      %447 = vmatpush1.bf16.msra.mxu0 %v407
      %448 = vmatprep.subr.bf16.mxu0 0
      %449 = vmatpush1.bf16.msra.mxu0 %v408
      %450 = vmatprep.subr.bf16.mxu0 0
      %451 = vmatpush1.bf16.msra.mxu0 %v409
      %452 = vmatprep.subr.bf16.mxu0 0
      %453 = vmatpush1.bf16.msra.mxu0 %v410
      %454 = vmatprep.subr.bf16.mxu0 0
      %455 = vmatpush1.bf16.msra.mxu0 %v411
      %456 = vmatprep.subr.bf16.mxu0 0
      %457 = vmatpush1.bf16.msra.mxu0 %v412
      %458 = vmatprep.subr.bf16.mxu0 0
      %459 = vmatpush1.bf16.msra.mxu0 %v413
      %460 = vmatprep.subr.bf16.mxu0 0
      %461 = vmatpush1.bf16.msra.mxu0 %v414
      %462 = vmatprep.subr.bf16.mxu0 0
      %463 = vmatpush1.bf16.msra.mxu0 %v415
      %464 = vmatprep.mubr.bf16.mxu0 %v329
      %465 = vmatmul.mubr.bf16.gmra.mrb[0].mxu0 %v328
      %v466 = vpop.f32.mrb[0].mxu0
      %v467 = vadd.f32 0.0, %v466
      %v468 = vpop.f32.mrb[0].mxu0
      %v469 = vpop.f32.mrb[0].mxu0
      %v470 = vadd.f32 0.0, %v469
      %v471 = vpop.f32.mrb[0].mxu0
      %472 = vmatprep.mubr.bf16.mxu0 %v331
      %473 = vmatmul.mubr.bf16.gmra.mrb[0].mxu0 %v330
      %v474 = vpop.f32.mrb[0].mxu0
      %v475 = vadd.f32 0.0, %v474
      %v476 = vpop.f32.mrb[0].mxu0
      %v477 = vpop.f32.mrb[0].mxu0
      %v478 = vadd.f32 0.0, %v477
      %v479 = vpop.f32.mrb[0].mxu0
      %480 = vdwg.mxu0
      %v481 = vadd.f32 %v276, %v467
      %v482 = vadd.f32 %v277, %v470
      %v483 = vadd.f32 %v278, %v475
      %v484 = vadd.f32 %v279, %v478
      %485 = vst [vmem:[%s265] sm:$0xff] %v481
      %486 = vst [vmem:[%s265 + $0x8] sm:$0xff] %v482
      %487 = vst [vmem:[%s265 + $0x10] sm:$0xff] %v483
      %488 = vst [vmem:[%s265 + $0x18] sm:$0xff] %v484
      // Predicated region
      $region37: #{panet_forward.6} parent=31 // pred_check
        %p489 = pneg %p268
      $region38: #{panet_forward.6} parent=31 // pred_check_branch
        %491 = sbr.rel (%p489) target = $region40
      $region39: #{panet_forward.6} parent=31 // pred_region
        %v492 = vld [vmem:[%s265] sm:$0xff]
        %v493 = vld [vmem:[%s265 + $0x8] sm:$0xff]
        %v494 = vld [vmem:[%s265 + $0x10] sm:$0xff]
        %v495 = vld [vmem:[%s265 + $0x18] sm:$0xff]
        %v496 = vld [vmem:[%s257] sm:$0x1]
        %v498 = vlaneseq
        %v499 = vshrl.u32 %v498, 7
        %v500 = vsub.s32 0, %v499
        %v501 = vrot.slane %v496, %v500
        %v503 = vadd.f32 %v492, %v501
        %v504 = vadd.f32 %v493, %v501
        %v505 = vadd.f32 %v494, %v501
        %v506 = vadd.f32 %v495, %v501
        %v507 = vmax.f32 %v503, 0.0
        %v508 = vmax.f32 %v504, 0.0
        %v509 = vmax.f32 %v505, 0.0
        %v510 = vmax.f32 %v506, 0.0
        %511 = vst [vmem:[%s265] sm:$0xff] %v507
        %512 = vst [vmem:[%s265 + $0x8] sm:$0xff] %v508
        %513 = vst [vmem:[%s265 + $0x10] sm:$0xff] %v509
        %514 = vst [vmem:[%s265 + $0x18] sm:$0xff] %v510
      $region40: #{panet_forward.6} parent=31 // pred_fallthru
        _
      %s515 = smul.u32 4, %s19
      %p516 = scmp.lt.s32.totalorder %s515, 7
      %s517 = scalar_select %p516, %s515, 7
      %p518 = scmp.lt.s32.totalorder %s20, 0
      %s519 = scalar_select %p518, %s20, 0
      %s520 = sadd.s32 %s519, %s517
      %s521 = smul.addr %s520, 8
      %s522 = scalar_lea.vmem %s3, %s521
      // Predicated region
      $region41: #{panet_forward.6} parent=31 // pred_check
        %p523 = pneg %p135
      $region42: #{panet_forward.6} parent=31 // pred_check_branch
        %525 = sbr.rel (%p523) target = $region44
      $region43: #{panet_forward.6} parent=31 // pred_region
        %s526 = smul.u32 4, %s19
      $region44: #{panet_forward.6} parent=31 // pred_fallthru
        _
    $region32: #{panet_forward.6} parent=5 // pred_fallthru
      _
    %p527 = scmp.le.s32.totalorder 2, %s9
    // Predicated region
    $region45: #{panet_forward.6} parent=5 // pred_check
      %p528 = pneg %p527
    $region46: #{panet_forward.6} parent=5 // pred_check_branch
      %530 = sbr.rel (%p528) target = $region48
    $region47: #{panet_forward.6} parent=5 // pred_region
      %s531 = ssub.s32 %s9, 2
      // Predicated region
      $region49: #{panet_forward.6} parent=47 // pred_check
        %p532 = pneg %p141
      $region50: #{panet_forward.6} parent=47 // pred_check_branch
        %534 = sbr.rel (%p532) target = $region52
      $region51: #{panet_forward.6} parent=47 // pred_region
        %s535 = smul.u32 4, %s22
        %p536 = scmp.lt.s32.totalorder %s535, 7
        %s537 = scalar_select %p536, %s535, 7
        %p538 = scmp.lt.s32.totalorder %s23, 0
        %s539 = scalar_select %p538, %s23, 0
        %s540 = sadd.s32 %s539, %s537
        %s541 = smul.addr %s540, 8
        %s542 = scalar_lea.vmem %s3, %s541
      $region52: #{panet_forward.6} parent=47 // pred_fallthru
        _
    $region48: #{panet_forward.6} parent=5 // pred_fallthru
      _
  $region6: #{panet_forward.6} parent=0 // loop_footer
    %s13 = sadd.s32 1, %s9
  $region7: #{panet_forward.6} parent=0 // loop_footer_branch
    %8 = sbr.rel target = $region3
  $region8: #{panet_forward.6} parent=0 // loop_exit
    _

// kernel: squeeze.18
$region0: #{squeeze.18}
  %s0 = inlined_call_operand.vmem [shape: f32[1,2,1,16,16], index: 0, kind: input, shape index: {}]
  %s1 = inlined_call_operand.vmem [shape: f32[2,1,256], index: 1, kind: output, shape index: {}]
  $region1: #{squeeze.18} parent=0
    #allocation0 [shape = 'u8[16384]{0}', space=vmem, size = 0x4000, scoped, tag = 'scoped mem for output reshape']
    %v2 = vld [vmem:[%s0] ss:$8 sm:$0xf]
    %vm3 = vcmask 130048
    %4 = vst.msk [vmem:[#allocation0] ss:$8 sm:$0xf] %vm3, %v2
    %s5 = scalar_lea.vmem %s0, 7
    %v6 = vld [vmem:[%s5] ss:$8 sm:$0xf]
    %7 = vrot.lane.b32.xlu0 %v6, 112
    %v8 = vpop.permute.xlu0 %7
    %vm9 = vcmask 1048448
    %10 = vst.msk [vmem:[#allocation0] ss:$8 sm:$0xf] %vm9, %v8
    %s11 = scalar_lea.vmem %s0, 6
    %v12 = vld [vmem:[%s11] ss:$8 sm:$0xf]
    %13 = vrot.lane.b32.xlu0 %v12, 96
    %v14 = vpop.permute.xlu0 %13
    %vm15 = vcmask 917248
    %16 = vst.msk [vmem:[#allocation0] ss:$8 sm:$0xf] %vm15, %v14
    %s17 = scalar_lea.vmem %s0, 5
    %v18 = vld [vmem:[%s17] ss:$8 sm:$0xf]
    %19 = vrot.lane.b32.xlu0 %v18, 80
    %v20 = vpop.permute.xlu0 %19
    %vm21 = vcmask 786048
    %22 = vst.msk [vmem:[#allocation0] ss:$8 sm:$0xf] %vm21, %v20
    %s23 = scalar_lea.vmem %s0, 4
    %v24 = vld [vmem:[%s23] ss:$8 sm:$0xf]
    %25 = vrot.lane.b32.xlu0 %v24, 64
    %v26 = vpop.permute.xlu0 %25
    %vm27 = vcmask 654848
    %28 = vst.msk [vmem:[#allocation0] ss:$8 sm:$0xf] %vm27, %v26
    %s29 = scalar_lea.vmem %s0, 3
    %v30 = vld [vmem:[%s29] ss:$8 sm:$0xf]
    %31 = vrot.lane.b32.xlu0 %v30, 48
    %v32 = vpop.permute.xlu0 %31
    %vm33 = vcmask 523648
    %34 = vst.msk [vmem:[#allocation0] ss:$8 sm:$0xf] %vm33, %v32
    %s35 = scalar_lea.vmem %s0, 2
    %v36 = vld [vmem:[%s35] ss:$8 sm:$0xf]
    %37 = vrot.lane.b32.xlu0 %v36, 32
    %v38 = vpop.permute.xlu0 %37
    %vm39 = vcmask 392448
    %40 = vst.msk [vmem:[#allocation0] ss:$8 sm:$0xf] %vm39, %v38
    %s41 = scalar_lea.vmem %s0, 1
    %v42 = vld [vmem:[%s41] ss:$8 sm:$0xf]
    %43 = vrot.lane.b32.xlu0 %v42, 16
    %v44 = vpop.permute.xlu0 %43
    %vm45 = vcmask 261248
    %46 = vst.msk [vmem:[#allocation0] ss:$8 sm:$0xf] %vm45, %v44
    %s48 = sshllo.u32 0, 1
    %v50 = vld [vmem:[#allocation0] sm:%s48]
    %s51 = sshllo.u32 0, 1
    %52 = vst [vmem:[%s1] sm:%s51] %v50
    %s53 = scalar_lea.vmem [#allocation0], 8
    %v54 = vld [vmem:[%s53] sm:%s48]
    %s55 = sshllo.u32 0, 1
    %s56 = scalar_lea.vmem %s1, 1
    %57 = vst [vmem:[%s56] sm:%s55] %v54
    %s58 = scalar_lea.vmem [#allocation0], 16
    %v59 = vld [vmem:[%s58] sm:%s48]
    %s60 = sshllo.u32 0, 1
    %s61 = smul.addr 1, 2
    %s62 = scalar_lea.vmem %s1, %s61
    %63 = vst [vmem:[%s62] sm:%s60] %v59
    %s64 = scalar_lea.vmem [#allocation0], 24
    %v65 = vld [vmem:[%s64] sm:%s48]
    %s66 = sshllo.u32 0, 1
    %s67 = smul.addr 1, 3
    %s68 = scalar_lea.vmem %s1, %s67
    %69 = vst [vmem:[%s68] sm:%s66] %v65

// kernel: panet_forward.8
$region0: #{panet_forward.8}
  #allocation0 [shape = 'u32[]', space=smem, size = 0x4, offset = 0x4, fixed_abs, tag = 'smem constant byte address 0x4 - core index']
  #allocation1 [shape = 'u32[144,128]{1,0:T(1,128)}', space=vmem, size = 0x12000, scoped, tag = 'internal scratch']
  %s0 = inlined_call_operand.vmem [shape: f32[8,32], index: 0, kind: input, shape index: {}]
  %s1 = inlined_call_operand.vmem [shape: f32[32,128], index: 1, kind: input, shape index: {}]
  %s2 = inlined_call_operand.vmem [shape: f32[8,1], index: 2, kind: input, shape index: {}]
  %s3 = inlined_call_operand.vmem [shape: f32[1,128], index: 3, kind: input, shape index: {}]
  %s4 = inlined_call_operand.vmem [shape: f32[8,128], index: 4, kind: output, shape index: {}]
  %s5 = sld [smem:[#allocation0]]
  $region26: #{panet_forward.8} parent=0
    _
  %s7 = ssub.s32 1, %s5
  %s8 = scalar_select 0, %s7, %s5
  // Predicated region
  $region2: #{panet_forward.8} parent=0 // pred_check
    _
  $region3: #{panet_forward.8} parent=0 // pred_check_branch
    %10 = sbr.rel (0) target = $region5
  $region4: #{panet_forward.8} parent=0 // pred_region
    _
  $region5: #{panet_forward.8} parent=0 // pred_fallthru
    _
  // Predicated region
  $region6: #{panet_forward.8} parent=0 // pred_check
    _
  $region7: #{panet_forward.8} parent=0 // pred_check_branch
    %12 = sbr.rel (0) target = $region9
  $region8: #{panet_forward.8} parent=0 // pred_region
    _
  $region9: #{panet_forward.8} parent=0 // pred_fallthru
    _
  // Predicated region
  $region10: #{panet_forward.8} parent=0 // pred_check
    _
  $region11: #{panet_forward.8} parent=0 // pred_check_branch
    %14 = sbr.rel (0) target = $region13
  $region12: #{panet_forward.8} parent=0 // pred_region
    _
  $region13: #{panet_forward.8} parent=0 // pred_fallthru
    _
  // Predicated region
  $region14: #{panet_forward.8} parent=0 // pred_check
    _
  $region15: #{panet_forward.8} parent=0 // pred_check_branch
    %16 = sbr.rel (0) target = $region17
  $region16: #{panet_forward.8} parent=0 // pred_region
    _
  $region17: #{panet_forward.8} parent=0 // pred_fallthru
    _
  %v17 = vld [vmem:[%s0] sm:$0xff]
  %v18 = vld [vmem:[%s1] sm:$0xff]
  %v19 = vld [vmem:[%s1 + $0x8] sm:$0xff]
  %v20 = vld [vmem:[%s1 + $0x10] sm:$0xff]
  %v21 = vld [vmem:[%s1 + $0x18] sm:$0xff]
  %vm22 = vcmask 261120
  %v24 = vsel %vm22, %v17, 0
  %26 = vmatprep.subr.mxu0 0.0
  %27 = vmatpush1.msra.mxu0 %v18
  %28 = vmatprep.subr.mxu0 0.0
  %29 = vmatpush1.msra.mxu0 %v19
  %30 = vmatprep.subr.mxu0 0.0
  %31 = vmatpush1.msra.mxu0 %v20
  %32 = vmatprep.subr.mxu0 0.0
  %33 = vmatpush1.msra.mxu0 %v21
  %34 = vmatprep.subr.mxu0 0.0
  %35 = vmatpush1.msra.mxu0 0.0
  %36 = vmatprep.subr.mxu0 0.0
  %37 = vmatpush1.msra.mxu0 0.0
  %38 = vmatprep.subr.mxu0 0.0
  %39 = vmatpush1.msra.mxu0 0.0
  %40 = vmatprep.subr.mxu0 0.0
  %41 = vmatpush1.msra.mxu0 0.0
  %42 = vmatprep.subr.mxu0 0.0
  %43 = vmatpush1.msra.mxu0 0.0
  %44 = vmatprep.subr.mxu0 0.0
  %45 = vmatpush1.msra.mxu0 0.0
  %46 = vmatprep.subr.mxu0 0.0
  %47 = vmatpush1.msra.mxu0 0.0
  %48 = vmatprep.subr.mxu0 0.0
  %49 = vmatpush1.msra.mxu0 0.0
  %50 = vmatprep.subr.mxu0 0.0
  %51 = vmatpush1.msra.mxu0 0.0
  %52 = vmatprep.subr.mxu0 0.0
  %53 = vmatpush1.msra.mxu0 0.0
  %54 = vmatprep.subr.mxu0 0.0
  %55 = vmatpush1.msra.mxu0 0.0
  %56 = vmatprep.subr.mxu0 0.0
  %57 = vmatpush1.msra.mxu0 0.0
  %58 = vmatprep.subr.mxu0 0.0
  %59 = vmatpush1.msra.mxu0 0.0
  %60 = vmatprep.subr.mxu0 0.0
  %61 = vmatpush1.msra.mxu0 0.0
  %62 = vmatprep.subr.mxu0 0.0
  %63 = vmatpush1.msra.mxu0 0.0
  %64 = vmatprep.subr.mxu0 0.0
  %65 = vmatpush1.msra.mxu0 0.0
  %66 = vmatprep.subr.mxu0 0.0
  %67 = vmatpush1.msra.mxu0 0.0
  %68 = vmatprep.subr.mxu0 0.0
  %69 = vmatpush1.msra.mxu0 0.0
  %70 = vmatprep.subr.mxu0 0.0
  %71 = vmatpush1.msra.mxu0 0.0
  %72 = vmatprep.subr.mxu0 0.0
  %73 = vmatpush1.msra.mxu0 0.0
  %74 = vmatprep.subr.mxu0 0.0
  %75 = vmatpush1.msra.mxu0 0.0
  %76 = vmatprep.subr.mxu0 0.0
  %77 = vmatpush1.msra.mxu0 0.0
  %78 = vmatprep.subr.mxu0 0.0
  %79 = vmatpush1.msra.mxu0 0.0
  %80 = vmatprep.subr.mxu0 0.0
  %81 = vmatpush1.msra.mxu0 0.0
  %82 = vmatprep.subr.mxu0 0.0
  %83 = vmatpush1.msra.mxu0 0.0
  %84 = vmatprep.subr.mxu0 0.0
  %85 = vmatpush1.msra.mxu0 0.0
  %86 = vmatprep.subr.mxu0 0.0
  %87 = vmatpush1.msra.mxu0 0.0
  %88 = vmatprep.subr.mxu0 0.0
  %89 = vmatpush1.msra.mxu0 0.0
  %90 = vmatprep.mubr.f32.mxu0 0.0
  %91 = vmatmul.mubr.f32.gmra.mrb[0].mxu0 %v24
  %v92 = vpop.f32.mrb[0].mxu0
  %v93 = vadd.f32 0.0, %v92
  %v94 = vpop.f32.mrb[0].mxu0
  %95 = vdwg.mxu0
  %v96 = vld [vmem:[%s3] sm:$0x1]
  %v97 = vmax.f32 %v96, 0.0
  %v98 = vrsqrt.pop %v97
  %v99 = vmin.f32 %v98, 1e+08
  %v100 = vld [vmem:[%s2] sm:$0xff]
  %v101 = vmax.f32 %v100, 0.0
  %v102 = vrsqrt.pop %v101
  %v103 = vmin.f32 %v102, 1e+08
  %v104 = vmul.f32 %v103, 20.0
  %v106 = vlaneseq
  %v107 = vshrl.u32 %v106, 7
  %v108 = vsub.s32 0, %v107
  %v109 = vrot.slane %v99, %v108
  %112 = vset.pattern.permute.xlu0 0
  %113 = vperm.xlu0 %112, %v104
  %v114 = vpop.permute.xlu0 %113
  %v116 = vmul.f32 %v109, %v114
  %v117 = vmul.f32 %v93, %v116
  %118 = vst [vmem:[%s4] sm:$0xff] %v117
  // Predicated region
  $region18: #{panet_forward.8} parent=0 // pred_check
    _
  $region19: #{panet_forward.8} parent=0 // pred_check_branch
    %120 = sbr.rel (0) target = $region21
  $region20: #{panet_forward.8} parent=0 // pred_region
    _
  $region21: #{panet_forward.8} parent=0 // pred_fallthru
    _
  // Predicated region
  $region22: #{panet_forward.8} parent=0 // pred_check
    _
  $region23: #{panet_forward.8} parent=0 // pred_check_branch
    %122 = sbr.rel (0) target = $region25
  $region24: #{panet_forward.8} parent=0 // pred_region
    _
  $region25: #{panet_forward.8} parent=0 // pred_fallthru
    _

// kernel: panet_forward.7
$region0: #{panet_forward.7}
  #allocation0 [shape = 'u32[]', space=smem, size = 0x4, offset = 0x4, fixed_abs, tag = 'smem constant byte address 0x4 - core index']
  #allocation1 [shape = 'u32[144,128]{1,0:T(1,128)}', space=vmem, size = 0x12000, scoped, tag = 'internal scratch']
  #allocation2 [shape = 'f32[8,128]{1,0:T(8,128)}', space=vmem, size = 0x1000, scoped, tag = 'scratch operand']
  %s0 = inlined_call_operand.vmem [shape: f32[2,256,128], index: 0, kind: input, shape index: {}]
  %s1 = inlined_call_operand.vmem [shape: f32[2,8,256], index: 1, kind: input, shape index: {}]
  %s2 = inlined_call_operand.vmem [shape: f32[2,8,1], index: 2, kind: input, shape index: {}]
  %s3 = inlined_call_operand.vmem [shape: f32[2,8,128], index: 3, kind: output, shape index: {}]
  %s4 = sld [smem:[#allocation0]]
  $region53: #{panet_forward.7} parent=0
    _
  %s6 = ssub.s32 1, %s4
  %s7 = scalar_select 0, %s6, %s4
  loop: start=0, step=1, limit=4
  $region2: #{panet_forward.7} parent=0 // loop_pre_header
    _
  $region3: #{panet_forward.7} parent=0 // loop_header
    %s9 = sphi 0, %s13
    %p10 = scmp.ge.s32.totalorder %s9, 4
    %s16 = sphi 0, %s28
    %s17 = sphi 0, %s24
    %s18 = sphi 0, %s16
    %s19 = sphi 0, %s17
    %s20 = sphi 0, %s18
    %s21 = sphi 0, %s19
    %s33 = sphi 0, %s35
    %s36 = sphi 0, %s33
    %s37 = sphi 0, %s36
    %s53 = sphi 0, %s37
    %s61 = sphi 0, %s63
    %s64 = sphi 0, %s61
    %s65 = sphi 0, %s64
    %s81 = sphi 0, %s65
    %s87 = sphi 0, %s89
    %s90 = sphi 0, %s87
    %s91 = sphi 0, %s90
    %s107 = sphi 0, %s91
    %s113 = sphi 0, %s115
    %s116 = sphi 0, %s113
    %s117 = sphi 0, %s116
    %s133 = sphi 0, %s117
  $region4: #{panet_forward.7} parent=0 // loop_header_branch
    %12 = sbr.rel (%p10) target = $region8
  $region5: #{panet_forward.7} parent=0 // loop_body
    %s14 = ssub.s32 %s9, 1
    %s15 = ssub.s32 %s9, 2
    %s22 = sadd.s32 1, %s17
    %p23 = scmp.ge.s32.totalorder %s22, 1
    %s24 = scalar_select %p23, 0, %s22
    %s25 = sadd.s32 1, %s16
    %s26 = scalar_select %p23, %s25, %s16
    %p27 = scmp.ge.s32.totalorder %s26, 2
    %s28 = scalar_select %p27, 0, %s26
    %s29 = ssub.s32 %s16, %s28
    %s30 = ssub.s32 %s17, %s24
    %s31 = sor.u32 %s29, %s30
    %p32 = scmp.eq.s32.totalorder %s31, 0
    %s34 = sadd.s32 %s33, 1
    %s35 = scalar_select %p32, %s33, %s34
    %p38 = pneg %p32
    %p39 = scmp.eq.s32.totalorder %s9, 1
    %p40 = por %p38, %p39
    %p41 = scmp.ne.s32.totalorder %s33, %s36
    %p42 = scmp.eq.s32.totalorder %s9, 0
    %p43 = por %p41, %p42
    %p44 = scmp.ne.s32.totalorder %s33, %s36
    %p45 = scmp.eq.s32.totalorder %s14, 1
    %p46 = por %p44, %p45
    %p47 = scmp.ne.s32.totalorder %s36, %s37
    %p48 = scmp.eq.s32.totalorder %s14, 0
    %p49 = por %p47, %p48
    %p50 = scmp.ne.s32.totalorder %s36, %s37
    %p51 = scmp.eq.s32.totalorder %s15, 1
    %p52 = por %p50, %p51
    %p54 = scmp.ne.s32.totalorder %s37, %s53
    %p55 = scmp.eq.s32.totalorder %s15, 0
    %p56 = por %p54, %p55
    %s57 = ssub.s32 %s16, %s28
    %s58 = ssub.s32 %s17, %s24
    %s59 = sor.u32 %s57, %s58
    %p60 = scmp.eq.s32.totalorder %s59, 0
    %s62 = sadd.s32 %s61, 1
    %s63 = scalar_select %p60, %s61, %s62
    %p66 = pneg %p60
    %p67 = scmp.eq.s32.totalorder %s9, 1
    %p68 = por %p66, %p67
    %p69 = scmp.ne.s32.totalorder %s61, %s64
    %p70 = scmp.eq.s32.totalorder %s9, 0
    %p71 = por %p69, %p70
    %p72 = scmp.ne.s32.totalorder %s61, %s64
    %p73 = scmp.eq.s32.totalorder %s14, 1
    %p74 = por %p72, %p73
    %p75 = scmp.ne.s32.totalorder %s64, %s65
    %p76 = scmp.eq.s32.totalorder %s14, 0
    %p77 = por %p75, %p76
    %p78 = scmp.ne.s32.totalorder %s64, %s65
    %p79 = scmp.eq.s32.totalorder %s15, 1
    %p80 = por %p78, %p79
    %p82 = scmp.ne.s32.totalorder %s65, %s81
    %p83 = scmp.eq.s32.totalorder %s15, 0
    %p84 = por %p82, %p83
    %s85 = ssub.s32 %s16, %s28
    %p86 = scmp.eq.s32.totalorder %s85, 0
    %s88 = sadd.s32 %s87, 1
    %s89 = scalar_select %p86, %s87, %s88
    %p92 = pneg %p86
    %p93 = scmp.eq.s32.totalorder %s9, 1
    %p94 = por %p92, %p93
    %p95 = scmp.ne.s32.totalorder %s87, %s90
    %p96 = scmp.eq.s32.totalorder %s9, 0
    %p97 = por %p95, %p96
    %p98 = scmp.ne.s32.totalorder %s87, %s90
    %p99 = scmp.eq.s32.totalorder %s14, 1
    %p100 = por %p98, %p99
    %p101 = scmp.ne.s32.totalorder %s90, %s91
    %p102 = scmp.eq.s32.totalorder %s14, 0
    %p103 = por %p101, %p102
    %p104 = scmp.ne.s32.totalorder %s90, %s91
    %p105 = scmp.eq.s32.totalorder %s15, 1
    %p106 = por %p104, %p105
    %p108 = scmp.ne.s32.totalorder %s91, %s107
    %p109 = scmp.eq.s32.totalorder %s15, 0
    %p110 = por %p108, %p109
    %s111 = ssub.s32 %s16, %s28
    %p112 = scmp.eq.s32.totalorder %s111, 0
    %s114 = sadd.s32 %s113, 1
    %s115 = scalar_select %p112, %s113, %s114
    %p118 = pneg %p112
    %p119 = scmp.eq.s32.totalorder %s9, 1
    %p120 = por %p118, %p119
    %p121 = scmp.ne.s32.totalorder %s113, %s116
    %p122 = scmp.eq.s32.totalorder %s9, 0
    %p123 = por %p121, %p122
    %p124 = scmp.ne.s32.totalorder %s113, %s116
    %p125 = scmp.eq.s32.totalorder %s14, 1
    %p126 = por %p124, %p125
    %p127 = scmp.ne.s32.totalorder %s116, %s117
    %p128 = scmp.eq.s32.totalorder %s14, 0
    %p129 = por %p127, %p128
    %p130 = scmp.ne.s32.totalorder %s116, %s117
    %p131 = scmp.eq.s32.totalorder %s15, 1
    %p132 = por %p130, %p131
    %p134 = scmp.ne.s32.totalorder %s117, %s133
    %p135 = scmp.eq.s32.totalorder %s15, 0
    %p136 = por %p134, %p135
    %p137 = scmp.le.s32.totalorder 1, %s9
    %p138 = scmp.lt.s32.totalorder %s9, 3
    %p139 = pnand %p137, %p138
    %p140 = pneg %p139
    // Predicated region
    $region9: #{panet_forward.7} parent=5 // pred_check
      _
    $region10: #{panet_forward.7} parent=5 // pred_check_branch
      %142 = sbr.rel (%p139) target = $region12
    $region11: #{panet_forward.7} parent=5 // pred_region
      %s143 = ssub.s32 %s9, 1
    $region12: #{panet_forward.7} parent=5 // pred_fallthru
      _
    %p144 = scmp.lt.s32.totalorder %s9, 2
    // Predicated region
    $region13: #{panet_forward.7} parent=5 // pred_check
      %p145 = pneg %p144
    $region14: #{panet_forward.7} parent=5 // pred_check_branch
      %147 = sbr.rel (%p145) target = $region16
    $region15: #{panet_forward.7} parent=5 // pred_region
      // Predicated region
      $region17: #{panet_forward.7} parent=15 // pred_check
        %p148 = pneg %p43
      $region18: #{panet_forward.7} parent=15 // pred_check_branch
        %150 = sbr.rel (%p148) target = $region20
      $region19: #{panet_forward.7} parent=15 // pred_region
        %s151 = smul.u32 32, %s17
        %p152 = scmp.lt.s32.totalorder %s16, 1
        %s153 = scalar_select %p152, %s16, 1
        %p154 = scmp.lt.s32.totalorder %s151, 31
        %s155 = scalar_select %p154, %s151, 31
        %s156 = smul.addr %s153, 32
        %s157 = sadd.s32 %s155, %s156
        %s158 = smul.addr %s157, 8
        %s159 = scalar_lea.vmem %s0, %s158
        %s160 = smul.u32 32, %s17
      $region20: #{panet_forward.7} parent=15 // pred_fallthru
        _
      // Predicated region
      $region21: #{panet_forward.7} parent=15 // pred_check
        %p161 = pneg %p71
      $region22: #{panet_forward.7} parent=15 // pred_check_branch
        %163 = sbr.rel (%p161) target = $region24
      $region23: #{panet_forward.7} parent=15 // pred_region
        %s164 = smul.u32 2, %s17
        %p165 = scmp.lt.s32.totalorder %s16, 1
        %s166 = scalar_select %p165, %s16, 1
        %p167 = scmp.lt.s32.totalorder %s164, 1
        %s168 = scalar_select %p167, %s164, 1
        %s169 = smul.addr %s166, 2
        %s170 = sadd.s32 %s168, %s169
        %s171 = smul.addr %s170, 8
        %s172 = scalar_lea.vmem %s1, %s171
        %s173 = smul.u32 2, %s17
      $region24: #{panet_forward.7} parent=15 // pred_fallthru
        _
      // Predicated region
      $region25: #{panet_forward.7} parent=15 // pred_check
        %p174 = pneg %p97
      $region26: #{panet_forward.7} parent=15 // pred_check_branch
        %176 = sbr.rel (%p174) target = $region28
      $region27: #{panet_forward.7} parent=15 // pred_region
        %p177 = scmp.lt.s32.totalorder %s16, 1
        %s178 = scalar_select %p177, %s16, 1
        %s179 = smul.addr %s178, 8
        %s180 = scalar_lea.vmem %s2, %s179
      $region28: #{panet_forward.7} parent=15 // pred_fallthru
        _
    $region16: #{panet_forward.7} parent=5 // pred_fallthru
      _
    %p181 = scmp.le.s32.totalorder 1, %s9
    %p182 = scmp.lt.s32.totalorder %s9, 3
    %p183 = pnand %p181, %p182
    %p184 = pneg %p183
    // Predicated region
    $region29: #{panet_forward.7} parent=5 // pred_check
      _
    $region30: #{panet_forward.7} parent=5 // pred_check_branch
      %186 = sbr.rel (%p183) target = $region32
    $region31: #{panet_forward.7} parent=5 // pred_region
      %s187 = ssub.s32 %s9, 1
      %s188 = smul.u32 32, %s19
      %p189 = scmp.lt.s32.totalorder %s18, 1
      %s190 = scalar_select %p189, %s18, 1
      %p191 = scmp.lt.s32.totalorder %s188, 31
      %s192 = scalar_select %p191, %s188, 31
      %s193 = smul.addr %s190, 32
      %s194 = sadd.s32 %s192, %s193
      %s195 = smul.addr %s194, 8
      %s196 = scalar_lea.vmem %s0, %s195
      %p197 = pneg %p49
      %p198 = pneg %p46
      %s199 = smul.u32 2, %s19
      %p200 = scmp.lt.s32.totalorder %s18, 1
      %s201 = scalar_select %p200, %s18, 1
      %p202 = scmp.lt.s32.totalorder %s199, 1
      %s203 = scalar_select %p202, %s199, 1
      %s204 = smul.addr %s201, 2
      %s205 = sadd.s32 %s203, %s204
      %s206 = smul.addr %s205, 8
      %s207 = scalar_lea.vmem %s1, %s206
      %p208 = pneg %p77
      %p209 = pneg %p74
      %p210 = scmp.lt.s32.totalorder %s18, 1
      %s211 = scalar_select %p210, %s18, 1
      %s212 = smul.addr %s211, 8
      %s213 = scalar_lea.vmem %s2, %s212
      %p214 = pneg %p103
      %p215 = pneg %p100
      %p216 = pneg %p129
      %p217 = pneg %p126
      %p218 = scmp.lt.s32.totalorder %s18, 1
      %s219 = scalar_select %p218, %s18, 1
      %s220 = smul.addr %s219, 8
      %s221 = scalar_lea.vmem %s3, %s220
      %s222 = smul.u32 32, %s19
      %p223 = scmp.lt.s32.totalorder %s18, 1
      %s224 = scalar_select %p223, %s18, 1
      %p225 = scmp.lt.s32.totalorder %s222, 31
      %s226 = scalar_select %p225, %s222, 31
      %s227 = smul.addr %s224, 32
      %s228 = sadd.s32 %s226, %s227
      %s229 = smul.addr %s228, 8
      %s230 = scalar_lea.vmem %s0, %s229
      %s231 = smul.u32 32, %s19
      %s232 = smul.u32 2, %s19
      %p233 = scmp.lt.s32.totalorder %s18, 1
      %s234 = scalar_select %p233, %s18, 1
      %p235 = scmp.lt.s32.totalorder %s232, 1
      %s236 = scalar_select %p235, %s232, 1
      %s237 = smul.addr %s234, 2
      %s238 = sadd.s32 %s236, %s237
      %s239 = smul.addr %s238, 8
      %s240 = scalar_lea.vmem %s1, %s239
      %s241 = smul.u32 2, %s19
      %p242 = scmp.lt.s32.totalorder %s18, 1
      %s243 = scalar_select %p242, %s18, 1
      %s244 = smul.addr %s243, 8
      %s245 = scalar_lea.vmem %s2, %s244
      %p246 = scmp.lt.s32.totalorder %s18, 1
      %s247 = scalar_select %p246, %s18, 1
      %s248 = smul.addr %s247, 8
      %s249 = scalar_lea.vmem %s3, %s248
      %p250 = scmp.eq.s32.totalorder %s19, 0
      // Predicated region
      $region33: #{panet_forward.7} parent=31 // pred_check
        %p251 = pneg %p250
      $region34: #{panet_forward.7} parent=31 // pred_check_branch
        %253 = sbr.rel (%p251) target = $region36
      $region35: #{panet_forward.7} parent=31 // pred_region
        %254 = vst [vmem:[#allocation2] sm:$0xff] 0.0
      $region36: #{panet_forward.7} parent=31 // pred_fallthru
        _
      %v255 = vld [vmem:[#allocation2] sm:$0xff]
      %v256 = vld [vmem:[%s240] sm:$0xff]
      %v257 = vld [vmem:[%s240 + $0x8] sm:$0xff]
      %v258 = vld [vmem:[%s230] sm:$0xff]
      %v259 = vld [vmem:[%s230 + $0x8] sm:$0xff]
      %v260 = vld [vmem:[%s230 + $0x10] sm:$0xff]
      %v261 = vld [vmem:[%s230 + $0x18] sm:$0xff]
      %v262 = vld [vmem:[%s230 + $0x20] sm:$0xff]
      %v263 = vld [vmem:[%s230 + $0x28] sm:$0xff]
      %v264 = vld [vmem:[%s230 + $0x30] sm:$0xff]
      %v265 = vld [vmem:[%s230 + $0x38] sm:$0xff]
      %v266 = vld [vmem:[%s230 + $0x40] sm:$0xff]
      %v267 = vld [vmem:[%s230 + $0x48] sm:$0xff]
      %v268 = vld [vmem:[%s230 + $0x50] sm:$0xff]
      %v269 = vld [vmem:[%s230 + $0x58] sm:$0xff]
      %v270 = vld [vmem:[%s230 + $0x60] sm:$0xff]
      %v271 = vld [vmem:[%s230 + $0x68] sm:$0xff]
      %v272 = vld [vmem:[%s230 + $0x70] sm:$0xff]
      %v273 = vld [vmem:[%s230 + $0x78] sm:$0xff]
      %v274 = vld [vmem:[%s230 + $0x80] sm:$0xff]
      %v275 = vld [vmem:[%s230 + $0x88] sm:$0xff]
      %v276 = vld [vmem:[%s230 + $0x90] sm:$0xff]
      %v277 = vld [vmem:[%s230 + $0x98] sm:$0xff]
      %v278 = vld [vmem:[%s230 + $0xa0] sm:$0xff]
      %v279 = vld [vmem:[%s230 + $0xa8] sm:$0xff]
      %v280 = vld [vmem:[%s230 + $0xb0] sm:$0xff]
      %v281 = vld [vmem:[%s230 + $0xb8] sm:$0xff]
      %v282 = vld [vmem:[%s230 + $0xc0] sm:$0xff]
      %v283 = vld [vmem:[%s230 + $0xc8] sm:$0xff]
      %v284 = vld [vmem:[%s230 + $0xd0] sm:$0xff]
      %v285 = vld [vmem:[%s230 + $0xd8] sm:$0xff]
      %v286 = vld [vmem:[%s230 + $0xe0] sm:$0xff]
      %v287 = vld [vmem:[%s230 + $0xe8] sm:$0xff]
      %v288 = vld [vmem:[%s230 + $0xf0] sm:$0xff]
      %v289 = vld [vmem:[%s230 + $0xf8] sm:$0xff]
      %290 = vmatprep.subr.mxu0 0.0
      %291 = vmatpush1.msra.mxu0 %v258
      %292 = vmatprep.subr.mxu0 0.0
      %293 = vmatpush1.msra.mxu0 %v259
      %294 = vmatprep.subr.mxu0 0.0
      %295 = vmatpush1.msra.mxu0 %v260
      %296 = vmatprep.subr.mxu0 0.0
      %297 = vmatpush1.msra.mxu0 %v261
      %298 = vmatprep.subr.mxu0 0.0
      %299 = vmatpush1.msra.mxu0 %v262
      %300 = vmatprep.subr.mxu0 0.0
      %301 = vmatpush1.msra.mxu0 %v263
      %302 = vmatprep.subr.mxu0 0.0
      %303 = vmatpush1.msra.mxu0 %v264
      %304 = vmatprep.subr.mxu0 0.0
      %305 = vmatpush1.msra.mxu0 %v265
      %306 = vmatprep.subr.mxu0 0.0
      %307 = vmatpush1.msra.mxu0 %v266
      %308 = vmatprep.subr.mxu0 0.0
      %309 = vmatpush1.msra.mxu0 %v267
      %310 = vmatprep.subr.mxu0 0.0
      %311 = vmatpush1.msra.mxu0 %v268
      %312 = vmatprep.subr.mxu0 0.0
      %313 = vmatpush1.msra.mxu0 %v269
      %314 = vmatprep.subr.mxu0 0.0
      %315 = vmatpush1.msra.mxu0 %v270
      %316 = vmatprep.subr.mxu0 0.0
      %317 = vmatpush1.msra.mxu0 %v271
      %318 = vmatprep.subr.mxu0 0.0
      %319 = vmatpush1.msra.mxu0 %v272
      %320 = vmatprep.subr.mxu0 0.0
      %321 = vmatpush1.msra.mxu0 %v273
      %322 = vmatprep.subr.mxu0 0.0
      %323 = vmatpush1.msra.mxu0 %v274
      %324 = vmatprep.subr.mxu0 0.0
      %325 = vmatpush1.msra.mxu0 %v275
      %326 = vmatprep.subr.mxu0 0.0
      %327 = vmatpush1.msra.mxu0 %v276
      %328 = vmatprep.subr.mxu0 0.0
      %329 = vmatpush1.msra.mxu0 %v277
      %330 = vmatprep.subr.mxu0 0.0
      %331 = vmatpush1.msra.mxu0 %v278
      %332 = vmatprep.subr.mxu0 0.0
      %333 = vmatpush1.msra.mxu0 %v279
      %334 = vmatprep.subr.mxu0 0.0
      %335 = vmatpush1.msra.mxu0 %v280
      %336 = vmatprep.subr.mxu0 0.0
      %337 = vmatpush1.msra.mxu0 %v281
      %338 = vmatprep.subr.mxu0 0.0
      %339 = vmatpush1.msra.mxu0 %v282
      %340 = vmatprep.subr.mxu0 0.0
      %341 = vmatpush1.msra.mxu0 %v283
      %342 = vmatprep.subr.mxu0 0.0
      %343 = vmatpush1.msra.mxu0 %v284
      %344 = vmatprep.subr.mxu0 0.0
      %345 = vmatpush1.msra.mxu0 %v285
      %346 = vmatprep.subr.mxu0 0.0
      %347 = vmatpush1.msra.mxu0 %v286
      %348 = vmatprep.subr.mxu0 0.0
      %349 = vmatpush1.msra.mxu0 %v287
      %350 = vmatprep.subr.mxu0 0.0
      %351 = vmatpush1.msra.mxu0 %v288
      %352 = vmatprep.subr.mxu0 0.0
      %353 = vmatpush1.msra.mxu0 %v289
      %354 = vmatprep.mubr.f32.mxu0 %v257
      %355 = vmatmul.mubr.f32.gmra.mrb[0].mxu0 %v256
      %v356 = vpop.f32.mrb[0].mxu0
      %v357 = vadd.f32 0.0, %v356
      %v358 = vpop.f32.mrb[0].mxu0
      %359 = vdwg.mxu0
      %v360 = vadd.f32 %v255, %v357
      %361 = vst [vmem:[#allocation2] sm:$0xff] %v360
      // Predicated region
      $region37: #{panet_forward.7} parent=31 // pred_check
        %p362 = pneg %p250
      $region38: #{panet_forward.7} parent=31 // pred_check_branch
        %364 = sbr.rel (%p362) target = $region40
      $region39: #{panet_forward.7} parent=31 // pred_region
        %v365 = vld [vmem:[#allocation2] sm:$0xff]
        %v366 = vld [vmem:[%s245] sm:$0xff]
        %368 = vset.pattern.permute.xlu0 0
        %369 = vperm.xlu0 %368, %v366
        %v370 = vpop.permute.xlu0 %369
        %v372 = vmul.f32 %v365, %v370
        %373 = vst [vmem:[%s249] sm:$0xff] %v372
      $region40: #{panet_forward.7} parent=31 // pred_fallthru
        _
      %p374 = scmp.lt.s32.totalorder %s18, 1
      %s375 = scalar_select %p374, %s18, 1
      %s376 = smul.addr %s375, 8
      %s377 = scalar_lea.vmem %s3, %s376
      // Predicated region
      $region41: #{panet_forward.7} parent=31 // pred_check
        %p378 = pneg %p126
      $region42: #{panet_forward.7} parent=31 // pred_check_branch
        %380 = sbr.rel (%p378) target = $region44
      $region43: #{panet_forward.7} parent=31 // pred_region
        _
      $region44: #{panet_forward.7} parent=31 // pred_fallthru
        _
    $region32: #{panet_forward.7} parent=5 // pred_fallthru
      _
    %p381 = scmp.le.s32.totalorder 2, %s9
    // Predicated region
    $region45: #{panet_forward.7} parent=5 // pred_check
      %p382 = pneg %p381
    $region46: #{panet_forward.7} parent=5 // pred_check_branch
      %384 = sbr.rel (%p382) target = $region48
    $region47: #{panet_forward.7} parent=5 // pred_region
      %s385 = ssub.s32 %s9, 2
      // Predicated region
      $region49: #{panet_forward.7} parent=47 // pred_check
        %p386 = pneg %p132
      $region50: #{panet_forward.7} parent=47 // pred_check_branch
        %388 = sbr.rel (%p386) target = $region52
      $region51: #{panet_forward.7} parent=47 // pred_region
        %p389 = scmp.lt.s32.totalorder %s20, 1
        %s390 = scalar_select %p389, %s20, 1
        %s391 = smul.addr %s390, 8
        %s392 = scalar_lea.vmem %s3, %s391
      $region52: #{panet_forward.7} parent=47 // pred_fallthru
        _
    $region48: #{panet_forward.7} parent=5 // pred_fallthru
      _
  $region6: #{panet_forward.7} parent=0 // loop_footer
    %s13 = sadd.s32 1, %s9
  $region7: #{panet_forward.7} parent=0 // loop_footer_branch
    %8 = sbr.rel target = $region3
  $region8: #{panet_forward.7} parent=0 // loop_exit
    _

// kernel: panet_forward.9
$region0: #{panet_forward.9}
  #allocation0 [shape = 'u32[]', space=smem, size = 0x4, offset = 0x4, fixed_abs, tag = 'smem constant byte address 0x4 - core index']
  #allocation1 [shape = 'u32[144,128]{1,0:T(1,128)}', space=vmem, size = 0x12000, scoped, tag = 'internal scratch']
  #allocation2 [shape = 'f32[8,128]{1,0:T(8,128)}', space=vmem, size = 0x1000, scoped, tag = 'scratch operand']
  %s0 = inlined_call_operand.vmem [shape: f32[1,128,128], index: 0, kind: input, shape index: {}]
  %s1 = inlined_call_operand.vmem [shape: f32[1,8,128], index: 1, kind: input, shape index: {}]
  %s2 = inlined_call_operand.vmem [shape: f32[1,8,1], index: 2, kind: input, shape index: {}]
  %s3 = inlined_call_operand.vmem [shape: f32[1,8,128], index: 3, kind: output, shape index: {}]
  %s4 = sld [smem:[#allocation0]]
  $region30: #{panet_forward.9} parent=0
    _
  %s6 = ssub.s32 1, %s4
  %s7 = scalar_select 0, %s6, %s4
  // Predicated region
  $region2: #{panet_forward.9} parent=0 // pred_check
    _
  $region3: #{panet_forward.9} parent=0 // pred_check_branch
    %9 = sbr.rel (0) target = $region5
  $region4: #{panet_forward.9} parent=0 // pred_region
    _
  $region5: #{panet_forward.9} parent=0 // pred_fallthru
    _
  // Predicated region
  $region6: #{panet_forward.9} parent=0 // pred_check
    _
  $region7: #{panet_forward.9} parent=0 // pred_check_branch
    %11 = sbr.rel (0) target = $region9
  $region8: #{panet_forward.9} parent=0 // pred_region
    _
  $region9: #{panet_forward.9} parent=0 // pred_fallthru
    _
  // Predicated region
  $region10: #{panet_forward.9} parent=0 // pred_check
    _
  $region11: #{panet_forward.9} parent=0 // pred_check_branch
    %13 = sbr.rel (0) target = $region13
  $region12: #{panet_forward.9} parent=0 // pred_region
    _
  $region13: #{panet_forward.9} parent=0 // pred_fallthru
    _
  %p14 = scmp.eq.s32.totalorder 0, 0
  // Predicated region
  $region14: #{panet_forward.9} parent=0 // pred_check
    %p15 = pneg %p14
  $region15: #{panet_forward.9} parent=0 // pred_check_branch
    %17 = sbr.rel (%p15) target = $region17
  $region16: #{panet_forward.9} parent=0 // pred_region
    %18 = vst [vmem:[#allocation2] sm:$0xff] 0.0
  $region17: #{panet_forward.9} parent=0 // pred_fallthru
    _
  %v19 = vld [vmem:[#allocation2] sm:$0xff]
  %v20 = vld [vmem:[%s1] sm:$0xff]
  %v21 = vld [vmem:[%s0] sm:$0xff]
  %v22 = vld [vmem:[%s0 + $0x8] sm:$0xff]
  %v23 = vld [vmem:[%s0 + $0x10] sm:$0xff]
  %v24 = vld [vmem:[%s0 + $0x18] sm:$0xff]
  %v25 = vld [vmem:[%s0 + $0x20] sm:$0xff]
  %v26 = vld [vmem:[%s0 + $0x28] sm:$0xff]
  %v27 = vld [vmem:[%s0 + $0x30] sm:$0xff]
  %v28 = vld [vmem:[%s0 + $0x38] sm:$0xff]
  %v29 = vld [vmem:[%s0 + $0x40] sm:$0xff]
  %v30 = vld [vmem:[%s0 + $0x48] sm:$0xff]
  %v31 = vld [vmem:[%s0 + $0x50] sm:$0xff]
  %v32 = vld [vmem:[%s0 + $0x58] sm:$0xff]
  %v33 = vld [vmem:[%s0 + $0x60] sm:$0xff]
  %v34 = vld [vmem:[%s0 + $0x68] sm:$0xff]
  %v35 = vld [vmem:[%s0 + $0x70] sm:$0xff]
  %v36 = vld [vmem:[%s0 + $0x78] sm:$0xff]
  %37 = vmatprep.subr.mxu0 0.0
  %38 = vmatpush1.msra.mxu0 %v21
  %39 = vmatprep.subr.mxu0 0.0
  %40 = vmatpush1.msra.mxu0 %v22
  %41 = vmatprep.subr.mxu0 0.0
  %42 = vmatpush1.msra.mxu0 %v23
  %43 = vmatprep.subr.mxu0 0.0
  %44 = vmatpush1.msra.mxu0 %v24
  %45 = vmatprep.subr.mxu0 0.0
  %46 = vmatpush1.msra.mxu0 %v25
  %47 = vmatprep.subr.mxu0 0.0
  %48 = vmatpush1.msra.mxu0 %v26
  %49 = vmatprep.subr.mxu0 0.0
  %50 = vmatpush1.msra.mxu0 %v27
  %51 = vmatprep.subr.mxu0 0.0
  %52 = vmatpush1.msra.mxu0 %v28
  %53 = vmatprep.subr.mxu0 0.0
  %54 = vmatpush1.msra.mxu0 %v29
  %55 = vmatprep.subr.mxu0 0.0
  %56 = vmatpush1.msra.mxu0 %v30
  %57 = vmatprep.subr.mxu0 0.0
  %58 = vmatpush1.msra.mxu0 %v31
  %59 = vmatprep.subr.mxu0 0.0
  %60 = vmatpush1.msra.mxu0 %v32
  %61 = vmatprep.subr.mxu0 0.0
  %62 = vmatpush1.msra.mxu0 %v33
  %63 = vmatprep.subr.mxu0 0.0
  %64 = vmatpush1.msra.mxu0 %v34
  %65 = vmatprep.subr.mxu0 0.0
  %66 = vmatpush1.msra.mxu0 %v35
  %67 = vmatprep.subr.mxu0 0.0
  %68 = vmatpush1.msra.mxu0 %v36
  %69 = vmatprep.subr.mxu0 0.0
  %70 = vmatpush1.msra.mxu0 0.0
  %71 = vmatprep.subr.mxu0 0.0
  %72 = vmatpush1.msra.mxu0 0.0
  %73 = vmatprep.subr.mxu0 0.0
  %74 = vmatpush1.msra.mxu0 0.0
  %75 = vmatprep.subr.mxu0 0.0
  %76 = vmatpush1.msra.mxu0 0.0
  %77 = vmatprep.subr.mxu0 0.0
  %78 = vmatpush1.msra.mxu0 0.0
  %79 = vmatprep.subr.mxu0 0.0
  %80 = vmatpush1.msra.mxu0 0.0
  %81 = vmatprep.subr.mxu0 0.0
  %82 = vmatpush1.msra.mxu0 0.0
  %83 = vmatprep.subr.mxu0 0.0
  %84 = vmatpush1.msra.mxu0 0.0
  %85 = vmatprep.subr.mxu0 0.0
  %86 = vmatpush1.msra.mxu0 0.0
  %87 = vmatprep.subr.mxu0 0.0
  %88 = vmatpush1.msra.mxu0 0.0
  %89 = vmatprep.subr.mxu0 0.0
  %90 = vmatpush1.msra.mxu0 0.0
  %91 = vmatprep.subr.mxu0 0.0
  %92 = vmatpush1.msra.mxu0 0.0
  %93 = vmatprep.subr.mxu0 0.0
  %94 = vmatpush1.msra.mxu0 0.0
  %95 = vmatprep.subr.mxu0 0.0
  %96 = vmatpush1.msra.mxu0 0.0
  %97 = vmatprep.subr.mxu0 0.0
  %98 = vmatpush1.msra.mxu0 0.0
  %99 = vmatprep.subr.mxu0 0.0
  %100 = vmatpush1.msra.mxu0 0.0
  %101 = vmatprep.mubr.f32.mxu0 0.0
  %102 = vmatmul.mubr.f32.gmra.mrb[0].mxu0 %v20
  %v103 = vpop.f32.mrb[0].mxu0
  %v104 = vadd.f32 0.0, %v103
  %v105 = vpop.f32.mrb[0].mxu0
  %106 = vdwg.mxu0
  %v107 = vadd.f32 %v19, %v104
  %108 = vst [vmem:[#allocation2] sm:$0xff] %v107
  // Predicated region
  $region18: #{panet_forward.9} parent=0 // pred_check
    %p109 = pneg %p14
  $region19: #{panet_forward.9} parent=0 // pred_check_branch
    %111 = sbr.rel (%p109) target = $region21
  $region20: #{panet_forward.9} parent=0 // pred_region
    %v112 = vld [vmem:[#allocation2] sm:$0xff]
    %v113 = vld [vmem:[%s2] sm:$0xff]
    %115 = vset.pattern.permute.xlu0 0
    %116 = vperm.xlu0 %115, %v113
    %v117 = vpop.permute.xlu0 %116
    %v119 = vmul.f32 %v112, %v117
    %120 = vst [vmem:[%s3] sm:$0xff] %v119
  $region21: #{panet_forward.9} parent=0 // pred_fallthru
    _
  // Predicated region
  $region22: #{panet_forward.9} parent=0 // pred_check
    _
  $region23: #{panet_forward.9} parent=0 // pred_check_branch
    %122 = sbr.rel (0) target = $region25
  $region24: #{panet_forward.9} parent=0 // pred_region
    _
  $region25: #{panet_forward.9} parent=0 // pred_fallthru
    _
  // Predicated region
  $region26: #{panet_forward.9} parent=0 // pred_check
    _
  $region27: #{panet_forward.9} parent=0 // pred_check_branch
    %124 = sbr.rel (0) target = $region29
  $region28: #{panet_forward.9} parent=0 // pred_region
    _
  $region29: #{panet_forward.9} parent=0 // pred_fallthru
    _

</llo_original>
